<compile_context>
chip_gen: v6e
topology: v6e:2x2x1
jax: 0.10.0
libtpu: 0.0.40
codegen_flags: <defaults>
</compile_context>

<pallas_src>
import functools

import jax
import jax.numpy as jnp
from jax.experimental import pallas as pl
from jax.experimental.pallas import tpu as pltpu


def _round_up(x, m):
    return (x + m - 1) // m * m


def _pick_t_block(seq_len, cap=32):
    """Largest divisor of seq_len that is <= cap (whole seq if small)."""
    if seq_len <= cap:
        return seq_len
    for d in range(cap, 0, -1):
        if seq_len % d == 0:
            return d
    return 1


def _pad_gate_cols(w, h, h_pad):
    """Zero-pad each of the 4 gate blocks along the last axis from h to h_pad."""
    lead = w.shape[:-1]
    w4 = w.reshape(lead + (4, h))
    w4 = jnp.pad(w4, [(0, 0)] * len(lead) + [(0, 0), (0, h_pad - h)])
    return w4.reshape(lead + (4 * h_pad,))


def lstm_kernel(gx_ref, whh_ref, wfc_ref, bfc_ref, out_ref, h_sc, c_sc,
                *, hidden_pad, num_classes, t_blk):
    """Recurrent part of the LSTM + final fc/log-softmax.

    gx_ref  : (t_blk, B_pad, 4*H_pad)  precomputed x_t @ W_ih^T + (b_ih+b_hh)
    whh_ref : (H_pad, 4*H_pad)         recurrent weight (transposed, padded)
    wfc_ref : (H_pad, C_pad)           classifier weight (transposed, padded)
    bfc_ref : (1, C_pad)               classifier bias (padded)
    out_ref : (B_pad, C_pad)           final log-probs / sigmoid probs
    h_sc/c_sc : (B_pad, H_pad) VMEM scratch carrying the recurrent state.
    """
    tb = pl.program_id(0)
    H = hidden_pad

    # Zero the recurrent state on the first time block (h_0 = c_0 = 0).
    @pl.when(tb == 0)
    def _():
        h_sc[...] = jnp.zeros_like(h_sc)
        c_sc[...] = jnp.zeros_like(c_sc)

    def step(i, carry):
        h, c = carry
        # Only the recurrent matmul is inside the serial loop; the input
        # projection and both biases were folded into gx outside the kernel.
        gates = gx_ref[i] + jnp.dot(h, whh_ref[...],
                                    preferred_element_type=jnp.float32)
        # Lane-aligned gate blocks (H is a multiple of 128).
        i_g = jax.nn.sigmoid(gates[:, 0 * H:1 * H])
        f_g = jax.nn.sigmoid(gates[:, 1 * H:2 * H])
        g_g = jnp.tanh(gates[:, 2 * H:3 * H])
        o_g = jax.nn.sigmoid(gates[:, 3 * H:4 * H])
        c = f_g * c + i_g * g_g
        h = o_g * jnp.tanh(c)
        return (h, c)

    h, c = jax.lax.fori_loop(0, t_blk, step, (h_sc[...], c_sc[...]),
                             unroll=True)
    h_sc[...] = h
    c_sc[...] = c

    # On the final time block: fc on the last hidden state, then
    # LogSoftmax (masked to the real classes) or Sigmoid.
    @pl.when(tb == pl.num_programs(0) - 1)
    def _():
        logits = (jnp.dot(h, wfc_ref[...], preferred_element_type=jnp.float32)
                  + bfc_ref[...])                        # (B_pad, C_pad)
        if num_classes == 1:
            out_ref[...] = jax.nn.sigmoid(logits)
        else:
            lane = jax.lax.broadcasted_iota(jnp.int32, logits.shape, 1)
            masked = jnp.where(lane < num_classes, logits,
                               jnp.float32(-1e30))       # ignore padded classes
            m = jnp.max(masked, axis=1, keepdims=True)
            lse = jnp.log(jnp.sum(jnp.exp(masked - m), axis=1,
                                  keepdims=True)) + m
            out_ref[...] = masked - lse


def lstm_model_forward(x, params, *, hidden_dim, num_classes, t_blk=None):
    """x: (B, T, D) float32 -> (B, num_classes) float32."""
    B, T, D = x.shape
    H = hidden_dim
    C = num_classes

    # Padded sizes: lane-aligned gates/output, sublane-filled batch.
    Hp = _round_up(H, 128)
    Bp = _round_up(B, 8)
    Cp = _round_up(C, 128)

    if t_blk is None:
        t_blk = _pick_t_block(T)
    assert T % t_blk == 0, "seq_len must be divisible by the time block"

    f32 = jnp.float32
    # --- pad parameters (zero-padding is exact; see kernel header) ---------
    wih_p = _pad_gate_cols(params["wih_t"].astype(f32), H, Hp)        # (D, 4Hp)
    whh_p = _pad_gate_cols(
        jnp.pad(params["whh_t"].astype(f32), ((0, Hp - H), (0, 0))), H, Hp)  # (Hp, 4Hp)
    bias_p = _pad_gate_cols(
        (params["bih"] + params["bhh"]).astype(f32), H, Hp)           # (1, 4Hp)
    wfc_p = jnp.pad(params["wfc_t"].astype(f32),
                    ((0, Hp - H), (0, Cp - C)))                       # (Hp, Cp)
    bfc_p = jnp.pad(params["bfc"].astype(f32), ((0, 0), (0, Cp - C))) # (1, Cp)

    # --- hoisted input projection: one big matmul, emitted time-major ------
    x_p = jnp.pad(x.astype(f32), ((0, Bp - B), (0, 0), (0, 0)))       # (Bp, T, D)
    gx = jnp.einsum('btd,dg->tbg', x_p, wih_p) + bias_p               # (T, Bp, 4Hp)

    kernel = functools.partial(lstm_kernel, hidden_pad=Hp,
                               num_classes=C, t_blk=t_blk)

    out_p = pl.pallas_call(
        kernel,
        out_shape=jax.ShapeDtypeStruct((Bp, Cp), jnp.float32),
        grid_spec=pltpu.PrefetchScalarGridSpec(
            num_scalar_prefetch=0,
            grid=(T // t_blk,),
            in_specs=[
                pl.BlockSpec((t_blk, Bp, 4 * Hp), lambda tb: (tb, 0, 0)),  # gx
                pl.BlockSpec((Hp, 4 * Hp), lambda tb: (0, 0)),             # W_hh^T
                pl.BlockSpec((Hp, Cp), lambda tb: (0, 0)),                 # W_fc^T
                pl.BlockSpec((1, Cp), lambda tb: (0, 0)),                  # b_fc
            ],
            out_specs=pl.BlockSpec((Bp, Cp), lambda tb: (0, 0)),
            scratch_shapes=[
                pltpu.VMEM((Bp, Hp), jnp.float32),  # h state
                pltpu.VMEM((Bp, Hp), jnp.float32),  # c state
            ],
        ),
        # Time recurrence is serial -> "arbitrary".
        compiler_params=pltpu.CompilerParams(
            dimension_semantics=("arbitrary",)),
    )(gx, whh_p, wfc_p, bfc_p)

    return out_p[:B, :C]


def reference_forward(x, params, *, hidden_dim, num_classes):
    """Pure-JAX reference for correctness checking (matches PyTorch module)."""
    B, T, D = x.shape
    H = hidden_dim

    def step(carry, x_t):
        h, c = carry
        gates = (x_t @ params["wih_t"] + h @ params["whh_t"]
                 + params["bih"] + params["bhh"])
        i = jax.nn.sigmoid(gates[:, 0 * H:1 * H])
        f = jax.nn.sigmoid(gates[:, 1 * H:2 * H])
        g = jnp.tanh(gates[:, 2 * H:3 * H])
        o = jax.nn.sigmoid(gates[:, 3 * H:4 * H])
        c = f * c + i * g
        h = o * jnp.tanh(c)
        return (h, c), None

    h0 = jnp.zeros((B, H), jnp.float32)
    c0 = jnp.zeros((B, H), jnp.float32)
    (h, _), _ = jax.lax.scan(step, (h0, c0), jnp.transpose(x, (1, 0, 2)))
    logits = h @ params["wfc_t"] + params["bfc"]
    if num_classes == 1:
        return jax.nn.sigmoid(logits)
    return jax.nn.log_softmax(logits, axis=1)


def init_params(key, *, input_dim, hidden_dim, num_classes):
    """Deterministic parameter init (PyTorch-style uniform ±1/sqrt(H))."""
    H, D, C = hidden_dim, input_dim, num_classes
    k = 1.0 / jnp.sqrt(H)
    keys = jax.random.split(key, 6)
    return {
        # stored pre-transposed for the kernel's matmul layout
        "wih_t": jax.random.uniform(keys[0], (D, 4 * H), jnp.float32, -k, k),
        "whh_t": jax.random.uniform(keys[1], (H, 4 * H), jnp.float32, -k, k),
        "bih": jax.random.uniform(keys[2], (1, 4 * H), jnp.float32, -k, k),
        "bhh": jax.random.uniform(keys[3], (1, 4 * H), jnp.float32, -k, k),
        "wfc_t": jax.random.uniform(keys[4], (H, C), jnp.float32, -k, k),
        "bfc": jax.random.uniform(keys[5], (1, C), jnp.float32, -k, k),
    }


if __name__ == "__main__":
    # Small shapes consistent with the module (batch, seq, input_dim).
    B, T, D = 4, 8, 16
    HIDDEN = 32
    NUM_CLASSES = 5

    key = jax.random.PRNGKey(0)
    kx, kp = jax.random.split(key)
    x = jax.random.normal(kx, (B, T, D), jnp.float32)
    params = init_params(kp, input_dim=D, hidden_dim=HIDDEN,
                         num_classes=NUM_CLASSES)

    out = lstm_model_forward(x, params, hidden_dim=HIDDEN,
                             num_classes=NUM_CLASSES)
    out = jax.block_until_ready(out)

    ref = reference_forward(x, params, hidden_dim=HIDDEN,
                            num_classes=NUM_CLASSES)
    assert out.shape == (B, NUM_CLASSES)
    assert jnp.allclose(out, ref, atol=1e-4, rtol=1e-4), "mismatch vs reference"

    print("KERNEL_OK")
</pallas_src>

<mosaic_0001>
module attributes {stable_mosaic.version = 11 : i64} {
  func.func @lstm_kernel(%arg0: i32, %arg1: memref<8x8x512xf32, #tpu.memory_space<vmem>>, %arg2: memref<128x512xf32, #tpu.memory_space<vmem>>, %arg3: memref<128x128xf32, #tpu.memory_space<vmem>>, %arg4: memref<1x128xf32, #tpu.memory_space<vmem>>, %arg5: memref<8x128xf32, #tpu.memory_space<vmem>>, %arg6: memref<8x128xf32, #tpu.memory_space<vmem>>, %arg7: memref<8x128xf32, #tpu.memory_space<vmem>>) attributes {dimension_semantics = [#tpu.dimension_semantics<arbitrary>], iteration_bounds = array<i64: 1>, scalar_prefetch = 0 : i64, scratch_operands = 2 : i64, tpu.core_type = #tpu.core_type<tc>, window_params = [{transform_indices = @transform_0, window_bounds = array<i64: 8, 8, 512>}, {pipeline_mode = #tpu.pipeline_mode<synchronous>, transform_indices = @transform_1, window_bounds = array<i64: 128, 512>}, {pipeline_mode = #tpu.pipeline_mode<synchronous>, transform_indices = @transform_2, window_bounds = array<i64: 128, 128>}, {pipeline_mode = #tpu.pipeline_mode<synchronous>, transform_indices = @transform_3, window_bounds = array<i64: 1, 128>}, {pipeline_mode = #tpu.pipeline_mode<synchronous>, transform_indices = @transform_4, window_bounds = array<i64: 8, 128>}]} {
    %c0_i32 = arith.constant 0 : i32
    %0 = arith.cmpi eq, %arg0, %c0_i32 : i32
    %1 = arith.extui %0 : i1 to i32
    %c0_i32_0 = arith.constant 0 : i32
    %2 = arith.cmpi ne, %1, %c0_i32_0 : i32
    scf.if %2 {
      %cst_74 = arith.constant 0.000000e+00 : f32
      %258 = vector.broadcast %cst_74 : f32 to vector<8x128xf32>
      %c0_75 = arith.constant 0 : index
      %c0_76 = arith.constant 0 : index
      %259 = vector.load %arg6[%c0_75, %c0_76] : memref<8x128xf32, #tpu.memory_space<vmem>>, vector<8x128xf32>
      tpu.vector_store %arg6[%c0_75, %c0_76], %258 {strides = array<i32>} : memref<8x128xf32, #tpu.memory_space<vmem>>, vector<8x128xf32>,
      %cst_77 = arith.constant 0.000000e+00 : f32
      %260 = vector.broadcast %cst_77 : f32 to vector<8x128xf32>
      %c0_78 = arith.constant 0 : index
      %c0_79 = arith.constant 0 : index
      %261 = vector.load %arg7[%c0_78, %c0_79] : memref<8x128xf32, #tpu.memory_space<vmem>>, vector<8x128xf32>
      tpu.vector_store %arg7[%c0_78, %c0_79], %260 {strides = array<i32>} : memref<8x128xf32, #tpu.memory_space<vmem>>, vector<8x128xf32>,
    } else {
    }
    %c0 = arith.constant 0 : index
    %c0_1 = arith.constant 0 : index
    %3 = vector.load %arg6[%c0, %c0_1] : memref<8x128xf32, #tpu.memory_space<vmem>>, vector<8x128xf32>
    %c0_2 = arith.constant 0 : index
    %c0_3 = arith.constant 0 : index
    %4 = vector.load %arg7[%c0_2, %c0_3] : memref<8x128xf32, #tpu.memory_space<vmem>>, vector<8x128xf32>
    %c0_i32_4 = arith.constant 0 : i32
    %5 = arith.index_cast %c0_i32_4 : i32 to index
    %c0_5 = arith.constant 0 : index
    %c0_6 = arith.constant 0 : index
    %6 = vector.load %arg1[%5, %c0_5, %c0_6] : memref<8x8x512xf32, #tpu.memory_space<vmem>>, vector<1x8x512xf32>
    %7 = vector.shape_cast %6 : vector<1x8x512xf32> to vector<8x512xf32>
    %c0_7 = arith.constant 0 : index
    %c0_8 = arith.constant 0 : index
    %8 = vector.load %arg2[%c0_7, %c0_8] : memref<128x512xf32, #tpu.memory_space<vmem>>, vector<128x512xf32>
    %cst = arith.constant dense<0.000000e+00> : vector<8x512xf32>
    %9 = tpu.matmul %3, %8, %cst {dimension_numbers = #tpu.dot_dimension_numbers<[1], [0], [0], [1], [0, 0, 1, 1], [], []>} : vector<8x128xf32>, vector<128x512xf32>, vector<8x512xf32> -> vector<8x512xf32>
    %10 = arith.addf %7, %9 : vector<8x512xf32>
    %11 = vector.extract_strided_slice %10 {offsets = [0, 0], sizes = [8, 128], strides = [1, 1]} : vector<8x512xf32> to vector<8x128xf32>
    %12 = arith.negf %11 : vector<8x128xf32>
    %13 = math.exp %12 : vector<8x128xf32>
    %cst_9 = arith.constant 1.000000e+00 : f32
    %14 = vector.broadcast %cst_9 : f32 to vector<8x128xf32>
    %15 = arith.addf %14, %13 : vector<8x128xf32>
    %16 = arith.divf %14, %15 : vector<8x128xf32>
    %17 = vector.extract_strided_slice %10 {offsets = [0, 128], sizes = [8, 128], strides = [1, 1]} : vector<8x512xf32> to vector<8x128xf32>
    %18 = arith.negf %17 : vector<8x128xf32>
    %19 = math.exp %18 : vector<8x128xf32>
    %cst_10 = arith.constant 1.000000e+00 : f32
    %20 = vector.broadcast %cst_10 : f32 to vector<8x128xf32>
    %21 = arith.addf %20, %19 : vector<8x128xf32>
    %22 = arith.divf %20, %21 : vector<8x128xf32>
    %23 = vector.extract_strided_slice %10 {offsets = [0, 256], sizes = [8, 128], strides = [1, 1]} : vector<8x512xf32> to vector<8x128xf32>
    %24 = math.tanh %23 : vector<8x128xf32>
    %25 = vector.extract_strided_slice %10 {offsets = [0, 384], sizes = [8, 128], strides = [1, 1]} : vector<8x512xf32> to vector<8x128xf32>
    %26 = arith.negf %25 : vector<8x128xf32>
    %27 = math.exp %26 : vector<8x128xf32>
    %cst_11 = arith.constant 1.000000e+00 : f32
    %28 = vector.broadcast %cst_11 : f32 to vector<8x128xf32>
    %29 = arith.addf %28, %27 : vector<8x128xf32>
    %30 = arith.divf %28, %29 : vector<8x128xf32>
    %31 = arith.mulf %22, %4 : vector<8x128xf32>
    %32 = arith.mulf %16, %24 : vector<8x128xf32>
    %33 = arith.addf %31, %32 : vector<8x128xf32>
    %34 = math.tanh %33 : vector<8x128xf32>
    %35 = arith.mulf %30, %34 : vector<8x128xf32>
    %c1_i32 = arith.constant 1 : i32
    %36 = arith.index_cast %c1_i32 : i32 to index
    %c0_12 = arith.constant 0 : index
    %c0_13 = arith.constant 0 : index
    %37 = vector.load %arg1[%36, %c0_12, %c0_13] : memref<8x8x512xf32, #tpu.memory_space<vmem>>, vector<1x8x512xf32>
    %38 = vector.shape_cast %37 : vector<1x8x512xf32> to vector<8x512xf32>
    %c0_14 = arith.constant 0 : index
    %c0_15 = arith.constant 0 : index
    %39 = vector.load %arg2[%c0_14, %c0_15] : memref<128x512xf32, #tpu.memory_space<vmem>>, vector<128x512xf32>
    %cst_16 = arith.constant dense<0.000000e+00> : vector<8x512xf32>
    %40 = tpu.matmul %35, %39, %cst_16 {dimension_numbers = #tpu.dot_dimension_numbers<[1], [0], [0], [1], [0, 0, 1, 1], [], []>} : vector<8x128xf32>, vector<128x512xf32>, vector<8x512xf32> -> vector<8x512xf32>
    %41 = arith.addf %38, %40 : vector<8x512xf32>
    %42 = vector.extract_strided_slice %41 {offsets = [0, 0], sizes = [8, 128], strides = [1, 1]} : vector<8x512xf32> to vector<8x128xf32>
    %43 = arith.negf %42 : vector<8x128xf32>
    %44 = math.exp %43 : vector<8x128xf32>
    %cst_17 = arith.constant 1.000000e+00 : f32
    %45 = vector.broadcast %cst_17 : f32 to vector<8x128xf32>
    %46 = arith.addf %45, %44 : vector<8x128xf32>
    %47 = arith.divf %45, %46 : vector<8x128xf32>
    %48 = vector.extract_strided_slice %41 {offsets = [0, 128], sizes = [8, 128], strides = [1, 1]} : vector<8x512xf32> to vector<8x128xf32>
    %49 = arith.negf %48 : vector<8x128xf32>
    %50 = math.exp %49 : vector<8x128xf32>
    %cst_18 = arith.constant 1.000000e+00 : f32
    %51 = vector.broadcast %cst_18 : f32 to vector<8x128xf32>
    %52 = arith.addf %51, %50 : vector<8x128xf32>
    %53 = arith.divf %51, %52 : vector<8x128xf32>
    %54 = vector.extract_strided_slice %41 {offsets = [0, 256], sizes = [8, 128], strides = [1, 1]} : vector<8x512xf32> to vector<8x128xf32>
    %55 = math.tanh %54 : vector<8x128xf32>
    %56 = vector.extract_strided_slice %41 {offsets = [0, 384], sizes = [8, 128], strides = [1, 1]} : vector<8x512xf32> to vector<8x128xf32>
    %57 = arith.negf %56 : vector<8x128xf32>
    %58 = math.exp %57 : vector<8x128xf32>
    %cst_19 = arith.constant 1.000000e+00 : f32
    %59 = vector.broadcast %cst_19 : f32 to vector<8x128xf32>
    %60 = arith.addf %59, %58 : vector<8x128xf32>
    %61 = arith.divf %59, %60 : vector<8x128xf32>
    %62 = arith.mulf %53, %33 : vector<8x128xf32>
    %63 = arith.mulf %47, %55 : vector<8x128xf32>
    %64 = arith.addf %62, %63 : vector<8x128xf32>
    %65 = math.tanh %64 : vector<8x128xf32>
    %66 = arith.mulf %61, %65 : vector<8x128xf32>
    %c2_i32 = arith.constant 2 : i32
    %67 = arith.index_cast %c2_i32 : i32 to index
    %c0_20 = arith.constant 0 : index
    %c0_21 = arith.constant 0 : index
    %68 = vector.load %arg1[%67, %c0_20, %c0_21] : memref<8x8x512xf32, #tpu.memory_space<vmem>>, vector<1x8x512xf32>
    %69 = vector.shape_cast %68 : vector<1x8x512xf32> to vector<8x512xf32>
    %c0_22 = arith.constant 0 : index
    %c0_23 = arith.constant 0 : index
    %70 = vector.load %arg2[%c0_22, %c0_23] : memref<128x512xf32, #tpu.memory_space<vmem>>, vector<128x512xf32>
    %cst_24 = arith.constant dense<0.000000e+00> : vector<8x512xf32>
    %71 = tpu.matmul %66, %70, %cst_24 {dimension_numbers = #tpu.dot_dimension_numbers<[1], [0], [0], [1], [0, 0, 1, 1], [], []>} : vector<8x128xf32>, vector<128x512xf32>, vector<8x512xf32> -> vector<8x512xf32>
    %72 = arith.addf %69, %71 : vector<8x512xf32>
    %73 = vector.extract_strided_slice %72 {offsets = [0, 0], sizes = [8, 128], strides = [1, 1]} : vector<8x512xf32> to vector<8x128xf32>
    %74 = arith.negf %73 : vector<8x128xf32>
    %75 = math.exp %74 : vector<8x128xf32>
    %cst_25 = arith.constant 1.000000e+00 : f32
    %76 = vector.broadcast %cst_25 : f32 to vector<8x128xf32>
    %77 = arith.addf %76, %75 : vector<8x128xf32>
    %78 = arith.divf %76, %77 : vector<8x128xf32>
    %79 = vector.extract_strided_slice %72 {offsets = [0, 128], sizes = [8, 128], strides = [1, 1]} : vector<8x512xf32> to vector<8x128xf32>
    %80 = arith.negf %79 : vector<8x128xf32>
    %81 = math.exp %80 : vector<8x128xf32>
    %cst_26 = arith.constant 1.000000e+00 : f32
    %82 = vector.broadcast %cst_26 : f32 to vector<8x128xf32>
    %83 = arith.addf %82, %81 : vector<8x128xf32>
    %84 = arith.divf %82, %83 : vector<8x128xf32>
    %85 = vector.extract_strided_slice %72 {offsets = [0, 256], sizes = [8, 128], strides = [1, 1]} : vector<8x512xf32> to vector<8x128xf32>
    %86 = math.tanh %85 : vector<8x128xf32>
    %87 = vector.extract_strided_slice %72 {offsets = [0, 384], sizes = [8, 128], strides = [1, 1]} : vector<8x512xf32> to vector<8x128xf32>
    %88 = arith.negf %87 : vector<8x128xf32>
    %89 = math.exp %88 : vector<8x128xf32>
    %cst_27 = arith.constant 1.000000e+00 : f32
    %90 = vector.broadcast %cst_27 : f32 to vector<8x128xf32>
    %91 = arith.addf %90, %89 : vector<8x128xf32>
    %92 = arith.divf %90, %91 : vector<8x128xf32>
    %93 = arith.mulf %84, %64 : vector<8x128xf32>
    %94 = arith.mulf %78, %86 : vector<8x128xf32>
    %95 = arith.addf %93, %94 : vector<8x128xf32>
    %96 = math.tanh %95 : vector<8x128xf32>
    %97 = arith.mulf %92, %96 : vector<8x128xf32>
    %c3_i32 = arith.constant 3 : i32
    %98 = arith.index_cast %c3_i32 : i32 to index
    %c0_28 = arith.constant 0 : index
    %c0_29 = arith.constant 0 : index
    %99 = vector.load %arg1[%98, %c0_28, %c0_29] : memref<8x8x512xf32, #tpu.memory_space<vmem>>, vector<1x8x512xf32>
    %100 = vector.shape_cast %99 : vector<1x8x512xf32> to vector<8x512xf32>
    %c0_30 = arith.constant 0 : index
    %c0_31 = arith.constant 0 : index
    %101 = vector.load %arg2[%c0_30, %c0_31] : memref<128x512xf32, #tpu.memory_space<vmem>>, vector<128x512xf32>
    %cst_32 = arith.constant dense<0.000000e+00> : vector<8x512xf32>
    %102 = tpu.matmul %97, %101, %cst_32 {dimension_numbers = #tpu.dot_dimension_numbers<[1], [0], [0], [1], [0, 0, 1, 1], [], []>} : vector<8x128xf32>, vector<128x512xf32>, vector<8x512xf32> -> vector<8x512xf32>
    %103 = arith.addf %100, %102 : vector<8x512xf32>
    %104 = vector.extract_strided_slice %103 {offsets = [0, 0], sizes = [8, 128], strides = [1, 1]} : vector<8x512xf32> to vector<8x128xf32>
    %105 = arith.negf %104 : vector<8x128xf32>
    %106 = math.exp %105 : vector<8x128xf32>
    %cst_33 = arith.constant 1.000000e+00 : f32
    %107 = vector.broadcast %cst_33 : f32 to vector<8x128xf32>
    %108 = arith.addf %107, %106 : vector<8x128xf32>
    %109 = arith.divf %107, %108 : vector<8x128xf32>
    %110 = vector.extract_strided_slice %103 {offsets = [0, 128], sizes = [8, 128], strides = [1, 1]} : vector<8x512xf32> to vector<8x128xf32>
    %111 = arith.negf %110 : vector<8x128xf32>
    %112 = math.exp %111 : vector<8x128xf32>
    %cst_34 = arith.constant 1.000000e+00 : f32
    %113 = vector.broadcast %cst_34 : f32 to vector<8x128xf32>
    %114 = arith.addf %113, %112 : vector<8x128xf32>
    %115 = arith.divf %113, %114 : vector<8x128xf32>
    %116 = vector.extract_strided_slice %103 {offsets = [0, 256], sizes = [8, 128], strides = [1, 1]} : vector<8x512xf32> to vector<8x128xf32>
    %117 = math.tanh %116 : vector<8x128xf32>
    %118 = vector.extract_strided_slice %103 {offsets = [0, 384], sizes = [8, 128], strides = [1, 1]} : vector<8x512xf32> to vector<8x128xf32>
    %119 = arith.negf %118 : vector<8x128xf32>
    %120 = math.exp %119 : vector<8x128xf32>
    %cst_35 = arith.constant 1.000000e+00 : f32
    %121 = vector.broadcast %cst_35 : f32 to vector<8x128xf32>
    %122 = arith.addf %121, %120 : vector<8x128xf32>
    %123 = arith.divf %121, %122 : vector<8x128xf32>
    %124 = arith.mulf %115, %95 : vector<8x128xf32>
    %125 = arith.mulf %109, %117 : vector<8x128xf32>
    %126 = arith.addf %124, %125 : vector<8x128xf32>
    %127 = math.tanh %126 : vector<8x128xf32>
    %128 = arith.mulf %123, %127 : vector<8x128xf32>
    %c4_i32 = arith.constant 4 : i32
    %129 = arith.index_cast %c4_i32 : i32 to index
    %c0_36 = arith.constant 0 : index
    %c0_37 = arith.constant 0 : index
    %130 = vector.load %arg1[%129, %c0_36, %c0_37] : memref<8x8x512xf32, #tpu.memory_space<vmem>>, vector<1x8x512xf32>
    %131 = vector.shape_cast %130 : vector<1x8x512xf32> to vector<8x512xf32>
    %c0_38 = arith.constant 0 : index
    %c0_39 = arith.constant 0 : index
    %132 = vector.load %arg2[%c0_38, %c0_39] : memref<128x512xf32, #tpu.memory_space<vmem>>, vector<128x512xf32>
    %cst_40 = arith.constant dense<0.000000e+00> : vector<8x512xf32>
    %133 = tpu.matmul %128, %132, %cst_40 {dimension_numbers = #tpu.dot_dimension_numbers<[1], [0], [0], [1], [0, 0, 1, 1], [], []>} : vector<8x128xf32>, vector<128x512xf32>, vector<8x512xf32> -> vector<8x512xf32>
    %134 = arith.addf %131, %133 : vector<8x512xf32>
    %135 = vector.extract_strided_slice %134 {offsets = [0, 0], sizes = [8, 128], strides = [1, 1]} : vector<8x512xf32> to vector<8x128xf32>
    %136 = arith.negf %135 : vector<8x128xf32>
    %137 = math.exp %136 : vector<8x128xf32>
    %cst_41 = arith.constant 1.000000e+00 : f32
    %138 = vector.broadcast %cst_41 : f32 to vector<8x128xf32>
    %139 = arith.addf %138, %137 : vector<8x128xf32>
    %140 = arith.divf %138, %139 : vector<8x128xf32>
    %141 = vector.extract_strided_slice %134 {offsets = [0, 128], sizes = [8, 128], strides = [1, 1]} : vector<8x512xf32> to vector<8x128xf32>
    %142 = arith.negf %141 : vector<8x128xf32>
    %143 = math.exp %142 : vector<8x128xf32>
    %cst_42 = arith.constant 1.000000e+00 : f32
    %144 = vector.broadcast %cst_42 : f32 to vector<8x128xf32>
    %145 = arith.addf %144, %143 : vector<8x128xf32>
    %146 = arith.divf %144, %145 : vector<8x128xf32>
    %147 = vector.extract_strided_slice %134 {offsets = [0, 256], sizes = [8, 128], strides = [1, 1]} : vector<8x512xf32> to vector<8x128xf32>
    %148 = math.tanh %147 : vector<8x128xf32>
    %149 = vector.extract_strided_slice %134 {offsets = [0, 384], sizes = [8, 128], strides = [1, 1]} : vector<8x512xf32> to vector<8x128xf32>
    %150 = arith.negf %149 : vector<8x128xf32>
    %151 = math.exp %150 : vector<8x128xf32>
    %cst_43 = arith.constant 1.000000e+00 : f32
    %152 = vector.broadcast %cst_43 : f32 to vector<8x128xf32>
    %153 = arith.addf %152, %151 : vector<8x128xf32>
    %154 = arith.divf %152, %153 : vector<8x128xf32>
    %155 = arith.mulf %146, %126 : vector<8x128xf32>
    %156 = arith.mulf %140, %148 : vector<8x128xf32>
    %157 = arith.addf %155, %156 : vector<8x128xf32>
    %158 = math.tanh %157 : vector<8x128xf32>
    %159 = arith.mulf %154, %158 : vector<8x128xf32>
    %c5_i32 = arith.constant 5 : i32
    %160 = arith.index_cast %c5_i32 : i32 to index
    %c0_44 = arith.constant 0 : index
    %c0_45 = arith.constant 0 : index
    %161 = vector.load %arg1[%160, %c0_44, %c0_45] : memref<8x8x512xf32, #tpu.memory_space<vmem>>, vector<1x8x512xf32>
    %162 = vector.shape_cast %161 : vector<1x8x512xf32> to vector<8x512xf32>
    %c0_46 = arith.constant 0 : index
    %c0_47 = arith.constant 0 : index
    %163 = vector.load %arg2[%c0_46, %c0_47] : memref<128x512xf32, #tpu.memory_space<vmem>>, vector<128x512xf32>
    %cst_48 = arith.constant dense<0.000000e+00> : vector<8x512xf32>
    %164 = tpu.matmul %159, %163, %cst_48 {dimension_numbers = #tpu.dot_dimension_numbers<[1], [0], [0], [1], [0, 0, 1, 1], [], []>} : vector<8x128xf32>, vector<128x512xf32>, vector<8x512xf32> -> vector<8x512xf32>
    %165 = arith.addf %162, %164 : vector<8x512xf32>
    %166 = vector.extract_strided_slice %165 {offsets = [0, 0], sizes = [8, 128], strides = [1, 1]} : vector<8x512xf32> to vector<8x128xf32>
    %167 = arith.negf %166 : vector<8x128xf32>
    %168 = math.exp %167 : vector<8x128xf32>
    %cst_49 = arith.constant 1.000000e+00 : f32
    %169 = vector.broadcast %cst_49 : f32 to vector<8x128xf32>
    %170 = arith.addf %169, %168 : vector<8x128xf32>
    %171 = arith.divf %169, %170 : vector<8x128xf32>
    %172 = vector.extract_strided_slice %165 {offsets = [0, 128], sizes = [8, 128], strides = [1, 1]} : vector<8x512xf32> to vector<8x128xf32>
    %173 = arith.negf %172 : vector<8x128xf32>
    %174 = math.exp %173 : vector<8x128xf32>
    %cst_50 = arith.constant 1.000000e+00 : f32
    %175 = vector.broadcast %cst_50 : f32 to vector<8x128xf32>
    %176 = arith.addf %175, %174 : vector<8x128xf32>
    %177 = arith.divf %175, %176 : vector<8x128xf32>
    %178 = vector.extract_strided_slice %165 {offsets = [0, 256], sizes = [8, 128], strides = [1, 1]} : vector<8x512xf32> to vector<8x128xf32>
    %179 = math.tanh %178 : vector<8x128xf32>
    %180 = vector.extract_strided_slice %165 {offsets = [0, 384], sizes = [8, 128], strides = [1, 1]} : vector<8x512xf32> to vector<8x128xf32>
    %181 = arith.negf %180 : vector<8x128xf32>
    %182 = math.exp %181 : vector<8x128xf32>
    %cst_51 = arith.constant 1.000000e+00 : f32
    %183 = vector.broadcast %cst_51 : f32 to vector<8x128xf32>
    %184 = arith.addf %183, %182 : vector<8x128xf32>
    %185 = arith.divf %183, %184 : vector<8x128xf32>
    %186 = arith.mulf %177, %157 : vector<8x128xf32>
    %187 = arith.mulf %171, %179 : vector<8x128xf32>
    %188 = arith.addf %186, %187 : vector<8x128xf32>
    %189 = math.tanh %188 : vector<8x128xf32>
    %190 = arith.mulf %185, %189 : vector<8x128xf32>
    %c6_i32 = arith.constant 6 : i32
    %191 = arith.index_cast %c6_i32 : i32 to index
    %c0_52 = arith.constant 0 : index
    %c0_53 = arith.constant 0 : index
    %192 = vector.load %arg1[%191, %c0_52, %c0_53] : memref<8x8x512xf32, #tpu.memory_space<vmem>>, vector<1x8x512xf32>
    %193 = vector.shape_cast %192 : vector<1x8x512xf32> to vector<8x512xf32>
    %c0_54 = arith.constant 0 : index
    %c0_55 = arith.constant 0 : index
    %194 = vector.load %arg2[%c0_54, %c0_55] : memref<128x512xf32, #tpu.memory_space<vmem>>, vector<128x512xf32>
    %cst_56 = arith.constant dense<0.000000e+00> : vector<8x512xf32>
    %195 = tpu.matmul %190, %194, %cst_56 {dimension_numbers = #tpu.dot_dimension_numbers<[1], [0], [0], [1], [0, 0, 1, 1], [], []>} : vector<8x128xf32>, vector<128x512xf32>, vector<8x512xf32> -> vector<8x512xf32>
    %196 = arith.addf %193, %195 : vector<8x512xf32>
    %197 = vector.extract_strided_slice %196 {offsets = [0, 0], sizes = [8, 128], strides = [1, 1]} : vector<8x512xf32> to vector<8x128xf32>
    %198 = arith.negf %197 : vector<8x128xf32>
    %199 = math.exp %198 : vector<8x128xf32>
    %cst_57 = arith.constant 1.000000e+00 : f32
    %200 = vector.broadcast %cst_57 : f32 to vector<8x128xf32>
    %201 = arith.addf %200, %199 : vector<8x128xf32>
    %202 = arith.divf %200, %201 : vector<8x128xf32>
    %203 = vector.extract_strided_slice %196 {offsets = [0, 128], sizes = [8, 128], strides = [1, 1]} : vector<8x512xf32> to vector<8x128xf32>
    %204 = arith.negf %203 : vector<8x128xf32>
    %205 = math.exp %204 : vector<8x128xf32>
    %cst_58 = arith.constant 1.000000e+00 : f32
    %206 = vector.broadcast %cst_58 : f32 to vector<8x128xf32>
    %207 = arith.addf %206, %205 : vector<8x128xf32>
    %208 = arith.divf %206, %207 : vector<8x128xf32>
    %209 = vector.extract_strided_slice %196 {offsets = [0, 256], sizes = [8, 128], strides = [1, 1]} : vector<8x512xf32> to vector<8x128xf32>
    %210 = math.tanh %209 : vector<8x128xf32>
    %211 = vector.extract_strided_slice %196 {offsets = [0, 384], sizes = [8, 128], strides = [1, 1]} : vector<8x512xf32> to vector<8x128xf32>
    %212 = arith.negf %211 : vector<8x128xf32>
    %213 = math.exp %212 : vector<8x128xf32>
    %cst_59 = arith.constant 1.000000e+00 : f32
    %214 = vector.broadcast %cst_59 : f32 to vector<8x128xf32>
    %215 = arith.addf %214, %213 : vector<8x128xf32>
    %216 = arith.divf %214, %215 : vector<8x128xf32>
    %217 = arith.mulf %208, %188 : vector<8x128xf32>
    %218 = arith.mulf %202, %210 : vector<8x128xf32>
    %219 = arith.addf %217, %218 : vector<8x128xf32>
    %220 = math.tanh %219 : vector<8x128xf32>
    %221 = arith.mulf %216, %220 : vector<8x128xf32>
    %c7_i32 = arith.constant 7 : i32
    %222 = arith.index_cast %c7_i32 : i32 to index
    %c0_60 = arith.constant 0 : index
    %c0_61 = arith.constant 0 : index
    %223 = vector.load %arg1[%222, %c0_60, %c0_61] : memref<8x8x512xf32, #tpu.memory_space<vmem>>, vector<1x8x512xf32>
    %224 = vector.shape_cast %223 : vector<1x8x512xf32> to vector<8x512xf32>
    %c0_62 = arith.constant 0 : index
    %c0_63 = arith.constant 0 : index
    %225 = vector.load %arg2[%c0_62, %c0_63] : memref<128x512xf32, #tpu.memory_space<vmem>>, vector<128x512xf32>
    %cst_64 = arith.constant dense<0.000000e+00> : vector<8x512xf32>
    %226 = tpu.matmul %221, %225, %cst_64 {dimension_numbers = #tpu.dot_dimension_numbers<[1], [0], [0], [1], [0, 0, 1, 1], [], []>} : vector<8x128xf32>, vector<128x512xf32>, vector<8x512xf32> -> vector<8x512xf32>
    %227 = arith.addf %224, %226 : vector<8x512xf32>
    %228 = vector.extract_strided_slice %227 {offsets = [0, 0], sizes = [8, 128], strides = [1, 1]} : vector<8x512xf32> to vector<8x128xf32>
    %229 = arith.negf %228 : vector<8x128xf32>
    %230 = math.exp %229 : vector<8x128xf32>
    %cst_65 = arith.constant 1.000000e+00 : f32
    %231 = vector.broadcast %cst_65 : f32 to vector<8x128xf32>
    %232 = arith.addf %231, %230 : vector<8x128xf32>
    %233 = arith.divf %231, %232 : vector<8x128xf32>
    %234 = vector.extract_strided_slice %227 {offsets = [0, 128], sizes = [8, 128], strides = [1, 1]} : vector<8x512xf32> to vector<8x128xf32>
    %235 = arith.negf %234 : vector<8x128xf32>
    %236 = math.exp %235 : vector<8x128xf32>
    %cst_66 = arith.constant 1.000000e+00 : f32
    %237 = vector.broadcast %cst_66 : f32 to vector<8x128xf32>
    %238 = arith.addf %237, %236 : vector<8x128xf32>
    %239 = arith.divf %237, %238 : vector<8x128xf32>
    %240 = vector.extract_strided_slice %227 {offsets = [0, 256], sizes = [8, 128], strides = [1, 1]} : vector<8x512xf32> to vector<8x128xf32>
    %241 = math.tanh %240 : vector<8x128xf32>
    %242 = vector.extract_strided_slice %227 {offsets = [0, 384], sizes = [8, 128], strides = [1, 1]} : vector<8x512xf32> to vector<8x128xf32>
    %243 = arith.negf %242 : vector<8x128xf32>
    %244 = math.exp %243 : vector<8x128xf32>
    %cst_67 = arith.constant 1.000000e+00 : f32
    %245 = vector.broadcast %cst_67 : f32 to vector<8x128xf32>
    %246 = arith.addf %245, %244 : vector<8x128xf32>
    %247 = arith.divf %245, %246 : vector<8x128xf32>
    %248 = arith.mulf %239, %219 : vector<8x128xf32>
    %249 = arith.mulf %233, %241 : vector<8x128xf32>
    %250 = arith.addf %248, %249 : vector<8x128xf32>
    %251 = math.tanh %250 : vector<8x128xf32>
    %252 = arith.mulf %247, %251 : vector<8x128xf32>
    %c8_i32 = arith.constant 8 : i32
    %c0_68 = arith.constant 0 : index
    %c0_69 = arith.constant 0 : index
    %253 = vector.load %arg6[%c0_68, %c0_69] : memref<8x128xf32, #tpu.memory_space<vmem>>, vector<8x128xf32>
    tpu.vector_store %arg6[%c0_68, %c0_69], %252 {strides = array<i32>} : memref<8x128xf32, #tpu.memory_space<vmem>>, vector<8x128xf32>,
    %c0_70 = arith.constant 0 : index
    %c0_71 = arith.constant 0 : index
    %254 = vector.load %arg7[%c0_70, %c0_71] : memref<8x128xf32, #tpu.memory_space<vmem>>, vector<8x128xf32>
    tpu.vector_store %arg7[%c0_70, %c0_71], %250 {strides = array<i32>} : memref<8x128xf32, #tpu.memory_space<vmem>>, vector<8x128xf32>,
    %c0_i32_72 = arith.constant 0 : i32
    %255 = arith.cmpi eq, %arg0, %c0_i32_72 : i32
    %256 = arith.extui %255 : i1 to i32
    %c0_i32_73 = arith.constant 0 : i32
    %257 = arith.cmpi ne, %256, %c0_i32_73 : i32
    scf.if %257 {
      %c0_74 = arith.constant 0 : index
      %c0_75 = arith.constant 0 : index
      %258 = vector.load %arg3[%c0_74, %c0_75] : memref<128x128xf32, #tpu.memory_space<vmem>>, vector<128x128xf32>
      %cst_76 = arith.constant dense<0.000000e+00> : vector<8x128xf32>
      %259 = tpu.matmul %252, %258, %cst_76 {dimension_numbers = #tpu.dot_dimension_numbers<[1], [0], [0], [1], [0, 0, 1, 1], [], []>} : vector<8x128xf32>, vector<128x128xf32>, vector<8x128xf32> -> vector<8x128xf32>
      %c0_77 = arith.constant 0 : index
      %c0_78 = arith.constant 0 : index
      %260 = vector.load %arg4[%c0_77, %c0_78] : memref<1x128xf32, #tpu.memory_space<vmem>>, vector<1x128xf32>
      %261 = vector.broadcast %260 : vector<1x128xf32> to vector<8x128xf32>
      %262 = arith.addf %259, %261 : vector<8x128xf32>
      %263 = tpu.iota {dimensions = array<i32: 1>} : vector<8x128xi32>
      %c5_i32_79 = arith.constant 5 : i32
      %264 = vector.broadcast %c5_i32_79 : i32 to vector<8x128xi32>
      %265 = arith.cmpi slt, %263, %264 : vector<8x128xi32>
      %cst_80 = arith.constant -1.000000e+30 : f32
      %266 = vector.broadcast %cst_80 : f32 to vector<8x128xf32>
      %267 = arith.select %265, %262, %266 : vector<8x128xi1>, vector<8x128xf32>
      %cst_81 = arith.constant dense<0xFF800000> : vector<8xf32>
      %268 = vector.multi_reduction <maximumf>, %267, %cst_81 [1] : vector<8x128xf32> to vector<8xf32>
      %269 = vector.shape_cast %268 : vector<8xf32> to vector<8x1xf32>
      %270 = vector.broadcast %269 : vector<8x1xf32> to vector<8x128xf32>
      %271 = arith.subf %267, %270 : vector<8x128xf32>
      %272 = math.exp %271 : vector<8x128xf32>
      %cst_82 = arith.constant dense<0.000000e+00> : vector<8xf32>
      %273 = vector.multi_reduction <add>, %272, %cst_82 [1] : vector<8x128xf32> to vector<8xf32>
      %274 = vector.shape_cast %273 : vector<8xf32> to vector<8x1xf32>
      %275 = math.log %274 : vector<8x1xf32>
      %276 = arith.addf %275, %269 : vector<8x1xf32>
      %277 = vector.broadcast %276 : vector<8x1xf32> to vector<8x128xf32>
      %278 = arith.subf %267, %277 : vector<8x128xf32>
      %c0_83 = arith.constant 0 : index
      %c0_84 = arith.constant 0 : index
      %279 = vector.load %arg5[%c0_83, %c0_84] : memref<8x128xf32, #tpu.memory_space<vmem>>, vector<8x128xf32>
      tpu.vector_store %arg5[%c0_83, %c0_84], %278 {strides = array<i32>} : memref<8x128xf32, #tpu.memory_space<vmem>>, vector<8x128xf32>,
    } else {
    }
    return
  }
  func.func @transform_0(%arg0: i32) -> (i32, i32, i32) {
    %c0_i32 = arith.constant 0 : i32
    %c0_i32_0 = arith.constant 0 : i32
    %c0_i32_1 = arith.constant 0 : i32
    return %arg0, %c0_i32, %c0_i32_0 : i32, i32, i32
  }
  func.func @transform_1(%arg0: i32) -> (i32, i32) {
    %c0_i32 = arith.constant 0 : i32
    %c0_i32_0 = arith.constant 0 : i32
    %c0_i32_1 = arith.constant 0 : i32
    return %c0_i32, %c0_i32_0 : i32, i32
  }
  func.func @transform_2(%arg0: i32) -> (i32, i32) {
    %c0_i32 = arith.constant 0 : i32
    %c0_i32_0 = arith.constant 0 : i32
    %c0_i32_1 = arith.constant 0 : i32
    return %c0_i32, %c0_i32_0 : i32, i32
  }
  func.func @transform_3(%arg0: i32) -> (i32, i32) {
    %c0_i32 = arith.constant 0 : i32
    %c0_i32_0 = arith.constant 0 : i32
    %c0_i32_1 = arith.constant 0 : i32
    return %c0_i32, %c0_i32_0 : i32, i32
  }
  func.func @transform_4(%arg0: i32) -> (i32, i32) {
    %c0_i32 = arith.constant 0 : i32
    %c0_i32_0 = arith.constant 0 : i32
    %c0_i32_1 = arith.constant 0 : i32
    return %c0_i32, %c0_i32_0 : i32, i32
  }
}

</mosaic_0001>

<llo_original>
// kernel: tpu_custom_call.1
$region0: #{tpu_custom_call.1}
  #allocation0 [shape = 'u32[]', space=smem, size = 0x4, offset = 0x4, fixed_abs, tag = 'smem constant byte address 0x4 - core index']
  #allocation1 [shape = 'u32[144,128]{1,0:T(1,128)}', space=vmem, size = 0x12000, scoped, tag = 'internal scratch']
  #allocation2 [shape = 'f32[8,128]{1,0:T(8,128)}', space=vmem, size = 0x1000, scoped, tag = 'scratch operand']
  #allocation3 [shape = 'f32[8,128]{1,0:T(8,128)}', space=vmem, size = 0x1000, scoped, tag = 'scratch operand']
  %s0 = inlined_call_operand.hbm [shape: f32[8,8,512], index: 0, kind: input, shape index: {}]
  %s1 = inlined_call_operand.hbm [shape: f32[128,512], index: 1, kind: input, shape index: {}]
  %s2 = inlined_call_operand.hbm [shape: f32[128,128], index: 2, kind: input, shape index: {}]
  %s3 = inlined_call_operand.vmem [shape: f32[1,128], index: 3, kind: input, shape index: {}]
  %s4 = inlined_call_operand.hbm [shape: f32[8,128], index: 4, kind: output, shape index: {}]
  %s5 = sld [smem:[#allocation0]]
  $region46: #{tpu_custom_call.1} parent=0
    _
  %s7 = ssub.s32 1, %s5
  %s8 = scalar_select 0, %s7, %s5
  $region1: #{tpu_custom_call.1} parent=0
    #allocation4 [shape = 'u8[131072]{0}', space=vmem, size = 0x20000, scoped, tag = 'input window, operand 0, single buffered']
    #allocation5 [shape = 's32[1]{0}', space=sflag, size = 0x4, scoped, tag = 'scoped memory for tpu_custom_call.1']
    #allocation6 [shape = 's32[1]{0}', space=sflag, size = 0x4, scoped, tag = 'scoped memory for tpu_custom_call.1']
    #allocation7 [shape = 'u8[262144]{0}', space=vmem, size = 0x40000, scoped, tag = 'input window, operand 1, single buffered']
    #allocation8 [shape = 's32[1]{0}', space=sflag, size = 0x4, scoped, tag = 'scoped memory for tpu_custom_call.1']
    #allocation9 [shape = 'u8[65536]{0}', space=vmem, size = 0x10000, scoped, tag = 'input window, operand 2, single buffered']
    #allocation10 [shape = 'u8[4096]{0}', space=vmem, size = 0x1000, scoped, tag = 'output window, operand 0, single buffered']
    %9 = vsyncpa [#allocation5], 0
    %10 = vsyncpa [#allocation8], 0
    %11 = vsyncpa [#allocation6], 0
    // Predicated region
    $region2: #{tpu_custom_call.1} parent=1 // pred_check
      _
    $region3: #{tpu_custom_call.1} parent=1 // pred_check_branch
      %13 = sbr.rel (0) target = $region5
    $region4: #{tpu_custom_call.1} parent=1 // pred_region
      %s15 = ssub.s32 4096, 4096
      %16 = vsyncadd [#allocation5], %s15
      %s17 = sshll.u32 [#allocation4], 4
      %s18 = int_to_ptr.vmem [resolvable:$true] %s17
      %23 = dma.hbm_to_vmem [thread:$0]  %s0, 4096, %s18, [#allocation5], 512, 512, 32
    $region5: #{tpu_custom_call.1} parent=1 // pred_fallthru
      _
    // Predicated region
    $region6: #{tpu_custom_call.1} parent=1 // pred_check
      _
    $region7: #{tpu_custom_call.1} parent=1 // pred_check_branch
      %25 = sbr.rel (0) target = $region9
    $region8: #{tpu_custom_call.1} parent=1 // pred_region
      %s27 = ssub.s32 8192, 8192
      %28 = vsyncadd [#allocation8], %s27
      %s29 = sshll.u32 [#allocation7], 4
      %s30 = int_to_ptr.vmem [resolvable:$true] %s29
      %35 = dma.hbm_to_vmem [thread:$0]  %s1, 8192, %s30, [#allocation8], 512, 512, 32
    $region9: #{tpu_custom_call.1} parent=1 // pred_fallthru
      _
    // Predicated region
    $region10: #{tpu_custom_call.1} parent=1 // pred_check
      _
    $region11: #{tpu_custom_call.1} parent=1 // pred_check_branch
      %37 = sbr.rel (0) target = $region13
    $region12: #{tpu_custom_call.1} parent=1 // pred_region
      %s39 = ssub.s32 2048, 2048
      %40 = vsyncadd [#allocation8], %s39
      %s41 = sshll.u32 [#allocation9], 4
      %s42 = int_to_ptr.vmem [resolvable:$true] %s41
      %47 = dma.hbm_to_vmem [thread:$0]  %s2, 2048, %s42, [#allocation8], 128, 128, 8
    $region13: #{tpu_custom_call.1} parent=1 // pred_fallthru
      _
    // Predicated region
    $region14: #{tpu_custom_call.1} parent=1 // pred_check
      _
    $region15: #{tpu_custom_call.1} parent=1 // pred_check_branch
      %49 = sbr.rel (0) target = $region17
    $region16: #{tpu_custom_call.1} parent=1 // pred_region
      _
    $region17: #{tpu_custom_call.1} parent=1 // pred_fallthru
      _
    // Predicated region
    $region18: #{tpu_custom_call.1} parent=1 // pred_check
      _
    $region19: #{tpu_custom_call.1} parent=1 // pred_check_branch
      %51 = sbr.rel (0) target = $region21
    $region20: #{tpu_custom_call.1} parent=1 // pred_region
      %52 = dma.done [#allocation5], 4096
    $region21: #{tpu_custom_call.1} parent=1 // pred_fallthru
      _
    // Predicated region
    $region22: #{tpu_custom_call.1} parent=1 // pred_check
      _
    $region23: #{tpu_custom_call.1} parent=1 // pred_check_branch
      %54 = sbr.rel (0) target = $region25
    $region24: #{tpu_custom_call.1} parent=1 // pred_region
      %55 = dma.done [#allocation8], 8192
    $region25: #{tpu_custom_call.1} parent=1 // pred_fallthru
      _
    // Predicated region
    $region26: #{tpu_custom_call.1} parent=1 // pred_check
      _
    $region27: #{tpu_custom_call.1} parent=1 // pred_check_branch
      %57 = sbr.rel (0) target = $region29
    $region28: #{tpu_custom_call.1} parent=1 // pred_region
      %58 = dma.done [#allocation8], 2048
    $region29: #{tpu_custom_call.1} parent=1 // pred_fallthru
      _
    %p59 = scmp.eq.s32.totalorder 0, 0
    // Predicated region
    $region30: #{tpu_custom_call.1} parent=1 // pred_check
      %p60 = pneg %p59
    $region31: #{tpu_custom_call.1} parent=1 // pred_check_branch
      %62 = sbr.rel (%p60) target = $region33
    $region32: #{tpu_custom_call.1} parent=1 // pred_region
      %63 = vst [vmem:[#allocation2] sm:$0xff] 0.0
      %64 = vst [vmem:[#allocation3] sm:$0xff] 0.0
    $region33: #{tpu_custom_call.1} parent=1 // pred_fallthru
      _
    %v65 = vld [vmem:[#allocation2] sm:$0xff]
    %v66 = vld [vmem:[#allocation3] sm:$0xff]
    %v67 = vld [vmem:[#allocation4] sm:$0xff]
    %v68 = vld [vmem:[#allocation4 + $0x8] sm:$0xff]
    %v69 = vld [vmem:[#allocation4 + $0x10] sm:$0xff]
    %v70 = vld [vmem:[#allocation4 + $0x18] sm:$0xff]
    %v71 = vld [vmem:[#allocation7] sm:$0xff]
    %v72 = vld [vmem:[#allocation7 + $0x8] sm:$0xff]
    %v73 = vld [vmem:[#allocation7 + $0x10] sm:$0xff]
    %v74 = vld [vmem:[#allocation7 + $0x18] sm:$0xff]
    %v75 = vld [vmem:[#allocation7 + $0x20] sm:$0xff]
    %v76 = vld [vmem:[#allocation7 + $0x28] sm:$0xff]
    %v77 = vld [vmem:[#allocation7 + $0x30] sm:$0xff]
    %v78 = vld [vmem:[#allocation7 + $0x38] sm:$0xff]
    %v79 = vld [vmem:[#allocation7 + $0x40] sm:$0xff]
    %v80 = vld [vmem:[#allocation7 + $0x48] sm:$0xff]
    %v81 = vld [vmem:[#allocation7 + $0x50] sm:$0xff]
    %v82 = vld [vmem:[#allocation7 + $0x58] sm:$0xff]
    %v83 = vld [vmem:[#allocation7 + $0x60] sm:$0xff]
    %v84 = vld [vmem:[#allocation7 + $0x68] sm:$0xff]
    %v85 = vld [vmem:[#allocation7 + $0x70] sm:$0xff]
    %v86 = vld [vmem:[#allocation7 + $0x78] sm:$0xff]
    %v87 = vld [vmem:[#allocation7 + $0x80] sm:$0xff]
    %v88 = vld [vmem:[#allocation7 + $0x88] sm:$0xff]
    %v89 = vld [vmem:[#allocation7 + $0x90] sm:$0xff]
    %v90 = vld [vmem:[#allocation7 + $0x98] sm:$0xff]
    %v91 = vld [vmem:[#allocation7 + $0xa0] sm:$0xff]
    %v92 = vld [vmem:[#allocation7 + $0xa8] sm:$0xff]
    %v93 = vld [vmem:[#allocation7 + $0xb0] sm:$0xff]
    %v94 = vld [vmem:[#allocation7 + $0xb8] sm:$0xff]
    %v95 = vld [vmem:[#allocation7 + $0xc0] sm:$0xff]
    %v96 = vld [vmem:[#allocation7 + $0xc8] sm:$0xff]
    %v97 = vld [vmem:[#allocation7 + $0xd0] sm:$0xff]
    %v98 = vld [vmem:[#allocation7 + $0xd8] sm:$0xff]
    %v99 = vld [vmem:[#allocation7 + $0xe0] sm:$0xff]
    %v100 = vld [vmem:[#allocation7 + $0xe8] sm:$0xff]
    %v101 = vld [vmem:[#allocation7 + $0xf0] sm:$0xff]
    %v102 = vld [vmem:[#allocation7 + $0xf8] sm:$0xff]
    %v103 = vld [vmem:[#allocation7 + $0x100] sm:$0xff]
    %v104 = vld [vmem:[#allocation7 + $0x108] sm:$0xff]
    %v105 = vld [vmem:[#allocation7 + $0x110] sm:$0xff]
    %v106 = vld [vmem:[#allocation7 + $0x118] sm:$0xff]
    %v107 = vld [vmem:[#allocation7 + $0x120] sm:$0xff]
    %v108 = vld [vmem:[#allocation7 + $0x128] sm:$0xff]
    %v109 = vld [vmem:[#allocation7 + $0x130] sm:$0xff]
    %v110 = vld [vmem:[#allocation7 + $0x138] sm:$0xff]
    %v111 = vld [vmem:[#allocation7 + $0x140] sm:$0xff]
    %v112 = vld [vmem:[#allocation7 + $0x148] sm:$0xff]
    %v113 = vld [vmem:[#allocation7 + $0x150] sm:$0xff]
    %v114 = vld [vmem:[#allocation7 + $0x158] sm:$0xff]
    %v115 = vld [vmem:[#allocation7 + $0x160] sm:$0xff]
    %v116 = vld [vmem:[#allocation7 + $0x168] sm:$0xff]
    %v117 = vld [vmem:[#allocation7 + $0x170] sm:$0xff]
    %v118 = vld [vmem:[#allocation7 + $0x178] sm:$0xff]
    %v119 = vld [vmem:[#allocation7 + $0x180] sm:$0xff]
    %v120 = vld [vmem:[#allocation7 + $0x188] sm:$0xff]
    %v121 = vld [vmem:[#allocation7 + $0x190] sm:$0xff]
    %v122 = vld [vmem:[#allocation7 + $0x198] sm:$0xff]
    %v123 = vld [vmem:[#allocation7 + $0x1a0] sm:$0xff]
    %v124 = vld [vmem:[#allocation7 + $0x1a8] sm:$0xff]
    %v125 = vld [vmem:[#allocation7 + $0x1b0] sm:$0xff]
    %v126 = vld [vmem:[#allocation7 + $0x1b8] sm:$0xff]
    %v127 = vld [vmem:[#allocation7 + $0x1c0] sm:$0xff]
    %v128 = vld [vmem:[#allocation7 + $0x1c8] sm:$0xff]
    %v129 = vld [vmem:[#allocation7 + $0x1d0] sm:$0xff]
    %v130 = vld [vmem:[#allocation7 + $0x1d8] sm:$0xff]
    %v131 = vld [vmem:[#allocation7 + $0x1e0] sm:$0xff]
    %v132 = vld [vmem:[#allocation7 + $0x1e8] sm:$0xff]
    %v133 = vld [vmem:[#allocation7 + $0x1f0] sm:$0xff]
    %v134 = vld [vmem:[#allocation7 + $0x1f8] sm:$0xff]
    %135 = vmatprep.subr.mxu0 %v132
    %136 = vmatpush1.msra.mxu0 %v131
    %137 = vmatprep.subr.mxu0 %v128
    %138 = vmatpush1.msra.mxu0 %v127
    %139 = vmatprep.subr.mxu0 %v124
    %140 = vmatpush1.msra.mxu0 %v123
    %141 = vmatprep.subr.mxu0 %v120
    %142 = vmatpush1.msra.mxu0 %v119
    %143 = vmatprep.subr.mxu0 %v116
    %144 = vmatpush1.msra.mxu0 %v115
    %145 = vmatprep.subr.mxu0 %v112
    %146 = vmatpush1.msra.mxu0 %v111
    %147 = vmatprep.subr.mxu0 %v108
    %148 = vmatpush1.msra.mxu0 %v107
    %149 = vmatprep.subr.mxu0 %v104
    %150 = vmatpush1.msra.mxu0 %v103
    %151 = vmatprep.subr.mxu0 %v100
    %152 = vmatpush1.msra.mxu0 %v99
    %153 = vmatprep.subr.mxu0 %v96
    %154 = vmatpush1.msra.mxu0 %v95
    %155 = vmatprep.subr.mxu0 %v92
    %156 = vmatpush1.msra.mxu0 %v91
    %157 = vmatprep.subr.mxu0 %v88
    %158 = vmatpush1.msra.mxu0 %v87
    %159 = vmatprep.subr.mxu0 %v84
    %160 = vmatpush1.msra.mxu0 %v83
    %161 = vmatprep.subr.mxu0 %v80
    %162 = vmatpush1.msra.mxu0 %v79
    %163 = vmatprep.subr.mxu0 %v76
    %164 = vmatpush1.msra.mxu0 %v75
    %165 = vmatprep.subr.mxu0 %v72
    %166 = vmatpush1.msra.mxu0 %v71
    %167 = vmatprep.subr.mxu0 0.0
    %168 = vmatpush2.msra.mxu0 0.0
    %169 = vmatprep.subr.mxu0 0.0
    %170 = vmatpush2.msra.mxu0 0.0
    %171 = vmatprep.subr.mxu0 0.0
    %172 = vmatpush2.msra.mxu0 0.0
    %173 = vmatprep.subr.mxu0 0.0
    %174 = vmatpush2.msra.mxu0 0.0
    %175 = vmatprep.subr.mxu0 0.0
    %176 = vmatpush2.msra.mxu0 0.0
    %177 = vmatprep.subr.mxu0 0.0
    %178 = vmatpush2.msra.mxu0 0.0
    %179 = vmatprep.subr.mxu0 0.0
    %180 = vmatpush2.msra.mxu0 0.0
    %181 = vmatprep.subr.mxu0 0.0
    %182 = vmatpush2.msra.mxu0 0.0
    %183 = vmatprep.subr.mxu0 0.0
    %184 = vmatpush2.msra.mxu0 0.0
    %185 = vmatprep.subr.mxu0 0.0
    %186 = vmatpush2.msra.mxu0 0.0
    %187 = vmatprep.subr.mxu0 0.0
    %188 = vmatpush2.msra.mxu0 0.0
    %189 = vmatprep.subr.mxu0 0.0
    %190 = vmatpush2.msra.mxu0 0.0
    %191 = vmatprep.subr.mxu0 0.0
    %192 = vmatpush2.msra.mxu0 0.0
    %193 = vmatprep.subr.mxu0 0.0
    %194 = vmatpush2.msra.mxu0 0.0
    %195 = vmatprep.subr.mxu0 0.0
    %196 = vmatpush2.msra.mxu0 0.0
    %197 = vmatprep.subr.mxu0 0.0
    %198 = vmatpush2.msra.mxu0 0.0
    %199 = vmatprep.mubr.f32.mxu0 0.0
    %200 = vmatmul.mubr.f32.gmra.mxu0 %v65
    %v201 = vpop.f32.mrf.mxu0
    %v202 = vadd.f32 0.0, %v201
    %v203 = vpop.f32.mrf.mxu0
    %v204 = vadd.f32 0.0, %v203
    %205 = vdwg.mxu0
    %206 = vmatprep.subr.mxu0 %v134
    %207 = vmatpush1.msra.mxu0 %v133
    %208 = vmatprep.subr.mxu0 %v130
    %209 = vmatpush1.msra.mxu0 %v129
    %210 = vmatprep.subr.mxu0 %v126
    %211 = vmatpush1.msra.mxu0 %v125
    %212 = vmatprep.subr.mxu0 %v122
    %213 = vmatpush1.msra.mxu0 %v121
    %214 = vmatprep.subr.mxu0 %v118
    %215 = vmatpush1.msra.mxu0 %v117
    %216 = vmatprep.subr.mxu0 %v114
    %217 = vmatpush1.msra.mxu0 %v113
    %218 = vmatprep.subr.mxu0 %v110
    %219 = vmatpush1.msra.mxu0 %v109
    %220 = vmatprep.subr.mxu0 %v106
    %221 = vmatpush1.msra.mxu0 %v105
    %222 = vmatprep.subr.mxu0 %v102
    %223 = vmatpush1.msra.mxu0 %v101
    %224 = vmatprep.subr.mxu0 %v98
    %225 = vmatpush1.msra.mxu0 %v97
    %226 = vmatprep.subr.mxu0 %v94
    %227 = vmatpush1.msra.mxu0 %v93
    %228 = vmatprep.subr.mxu0 %v90
    %229 = vmatpush1.msra.mxu0 %v89
    %230 = vmatprep.subr.mxu0 %v86
    %231 = vmatpush1.msra.mxu0 %v85
    %232 = vmatprep.subr.mxu0 %v82
    %233 = vmatpush1.msra.mxu0 %v81
    %234 = vmatprep.subr.mxu0 %v78
    %235 = vmatpush1.msra.mxu0 %v77
    %236 = vmatprep.subr.mxu0 %v74
    %237 = vmatpush1.msra.mxu0 %v73
    %238 = vmatprep.subr.mxu0 0.0
    %239 = vmatpush2.msra.mxu0 0.0
    %240 = vmatprep.subr.mxu0 0.0
    %241 = vmatpush2.msra.mxu0 0.0
    %242 = vmatprep.subr.mxu0 0.0
    %243 = vmatpush2.msra.mxu0 0.0
    %244 = vmatprep.subr.mxu0 0.0
    %245 = vmatpush2.msra.mxu0 0.0
    %246 = vmatprep.subr.mxu0 0.0
    %247 = vmatpush2.msra.mxu0 0.0
    %248 = vmatprep.subr.mxu0 0.0
    %249 = vmatpush2.msra.mxu0 0.0
    %250 = vmatprep.subr.mxu0 0.0
    %251 = vmatpush2.msra.mxu0 0.0
    %252 = vmatprep.subr.mxu0 0.0
    %253 = vmatpush2.msra.mxu0 0.0
    %254 = vmatprep.subr.mxu0 0.0
    %255 = vmatpush2.msra.mxu0 0.0
    %256 = vmatprep.subr.mxu0 0.0
    %257 = vmatpush2.msra.mxu0 0.0
    %258 = vmatprep.subr.mxu0 0.0
    %259 = vmatpush2.msra.mxu0 0.0
    %260 = vmatprep.subr.mxu0 0.0
    %261 = vmatpush2.msra.mxu0 0.0
    %262 = vmatprep.subr.mxu0 0.0
    %263 = vmatpush2.msra.mxu0 0.0
    %264 = vmatprep.subr.mxu0 0.0
    %265 = vmatpush2.msra.mxu0 0.0
    %266 = vmatprep.subr.mxu0 0.0
    %267 = vmatpush2.msra.mxu0 0.0
    %268 = vmatprep.subr.mxu0 0.0
    %269 = vmatpush2.msra.mxu0 0.0
    %270 = vmatprep.mubr.f32.mxu0 0.0
    %271 = vmatmul.mubr.f32.gmra.mxu0 %v65
    %v272 = vpop.f32.mrf.mxu0
    %v273 = vadd.f32 0.0, %v272
    %v274 = vpop.f32.mrf.mxu0
    %v275 = vadd.f32 0.0, %v274
    %276 = vdwg.mxu0
    %v277 = vadd.f32 %v67, %v202
    %v278 = vadd.f32 %v68, %v204
    %v279 = vadd.f32 %v69, %v273
    %v280 = vadd.f32 %v70, %v275
    %v281 = vxor.u32 %v277, 2147483648
    %v282 = vmul.f32 %v281, 1.442695
    %v283 = vpow.pop %v282
    %v284 = vadd.f32 %v283, 1.0
    %v285 = vrcp.pop %v284
    %v286 = vmul.f32 1.0, %v285
    %v287 = vxor.u32 %v278, 2147483648
    %v288 = vmul.f32 %v287, 1.442695
    %v289 = vpow.pop %v288
    %v290 = vadd.f32 %v289, 1.0
    %v291 = vrcp.pop %v290
    %v292 = vmul.f32 1.0, %v291
    %v293 = vtanh.pop %v279
    %v294 = vxor.u32 %v280, 2147483648
    %v295 = vmul.f32 %v294, 1.442695
    %v296 = vpow.pop %v295
    %v297 = vadd.f32 %v296, 1.0
    %v298 = vrcp.pop %v297
    %v299 = vmul.f32 1.0, %v298
    %v300 = vmul.f32 %v292, %v66
    %v301 = vmul.f32 %v286, %v293
    %v302 = vadd.f32 %v300, %v301
    %v303 = vtanh.pop %v302
    %v304 = vmul.f32 %v299, %v303
    %s305 = scalar_lea.vmem [#allocation4], 32
    %v306 = vld [vmem:[%s305] sm:$0xff]
    %v307 = vld [vmem:[%s305 + $0x8] sm:$0xff]
    %v308 = vld [vmem:[%s305 + $0x10] sm:$0xff]
    %v309 = vld [vmem:[%s305 + $0x18] sm:$0xff]
    %310 = vmatprep.subr.mxu0 %v132
    %311 = vmatpush1.msra.mxu0 %v131
    %312 = vmatprep.subr.mxu0 %v128
    %313 = vmatpush1.msra.mxu0 %v127
    %314 = vmatprep.subr.mxu0 %v124
    %315 = vmatpush1.msra.mxu0 %v123
    %316 = vmatprep.subr.mxu0 %v120
    %317 = vmatpush1.msra.mxu0 %v119
    %318 = vmatprep.subr.mxu0 %v116
    %319 = vmatpush1.msra.mxu0 %v115
    %320 = vmatprep.subr.mxu0 %v112
    %321 = vmatpush1.msra.mxu0 %v111
    %322 = vmatprep.subr.mxu0 %v108
    %323 = vmatpush1.msra.mxu0 %v107
    %324 = vmatprep.subr.mxu0 %v104
    %325 = vmatpush1.msra.mxu0 %v103
    %326 = vmatprep.subr.mxu0 %v100
    %327 = vmatpush1.msra.mxu0 %v99
    %328 = vmatprep.subr.mxu0 %v96
    %329 = vmatpush1.msra.mxu0 %v95
    %330 = vmatprep.subr.mxu0 %v92
    %331 = vmatpush1.msra.mxu0 %v91
    %332 = vmatprep.subr.mxu0 %v88
    %333 = vmatpush1.msra.mxu0 %v87
    %334 = vmatprep.subr.mxu0 %v84
    %335 = vmatpush1.msra.mxu0 %v83
    %336 = vmatprep.subr.mxu0 %v80
    %337 = vmatpush1.msra.mxu0 %v79
    %338 = vmatprep.subr.mxu0 %v76
    %339 = vmatpush1.msra.mxu0 %v75
    %340 = vmatprep.subr.mxu0 %v72
    %341 = vmatpush1.msra.mxu0 %v71
    %342 = vmatprep.subr.mxu0 0.0
    %343 = vmatpush2.msra.mxu0 0.0
    %344 = vmatprep.subr.mxu0 0.0
    %345 = vmatpush2.msra.mxu0 0.0
    %346 = vmatprep.subr.mxu0 0.0
    %347 = vmatpush2.msra.mxu0 0.0
    %348 = vmatprep.subr.mxu0 0.0
    %349 = vmatpush2.msra.mxu0 0.0
    %350 = vmatprep.subr.mxu0 0.0
    %351 = vmatpush2.msra.mxu0 0.0
    %352 = vmatprep.subr.mxu0 0.0
    %353 = vmatpush2.msra.mxu0 0.0
    %354 = vmatprep.subr.mxu0 0.0
    %355 = vmatpush2.msra.mxu0 0.0
    %356 = vmatprep.subr.mxu0 0.0
    %357 = vmatpush2.msra.mxu0 0.0
    %358 = vmatprep.subr.mxu0 0.0
    %359 = vmatpush2.msra.mxu0 0.0
    %360 = vmatprep.subr.mxu0 0.0
    %361 = vmatpush2.msra.mxu0 0.0
    %362 = vmatprep.subr.mxu0 0.0
    %363 = vmatpush2.msra.mxu0 0.0
    %364 = vmatprep.subr.mxu0 0.0
    %365 = vmatpush2.msra.mxu0 0.0
    %366 = vmatprep.subr.mxu0 0.0
    %367 = vmatpush2.msra.mxu0 0.0
    %368 = vmatprep.subr.mxu0 0.0
    %369 = vmatpush2.msra.mxu0 0.0
    %370 = vmatprep.subr.mxu0 0.0
    %371 = vmatpush2.msra.mxu0 0.0
    %372 = vmatprep.subr.mxu0 0.0
    %373 = vmatpush2.msra.mxu0 0.0
    %374 = vmatprep.mubr.f32.mxu0 0.0
    %375 = vmatmul.mubr.f32.gmra.mxu0 %v304
    %v376 = vpop.f32.mrf.mxu0
    %v377 = vadd.f32 0.0, %v376
    %v378 = vpop.f32.mrf.mxu0
    %v379 = vadd.f32 0.0, %v378
    %380 = vdwg.mxu0
    %381 = vmatprep.subr.mxu0 %v134
    %382 = vmatpush1.msra.mxu0 %v133
    %383 = vmatprep.subr.mxu0 %v130
    %384 = vmatpush1.msra.mxu0 %v129
    %385 = vmatprep.subr.mxu0 %v126
    %386 = vmatpush1.msra.mxu0 %v125
    %387 = vmatprep.subr.mxu0 %v122
    %388 = vmatpush1.msra.mxu0 %v121
    %389 = vmatprep.subr.mxu0 %v118
    %390 = vmatpush1.msra.mxu0 %v117
    %391 = vmatprep.subr.mxu0 %v114
    %392 = vmatpush1.msra.mxu0 %v113
    %393 = vmatprep.subr.mxu0 %v110
    %394 = vmatpush1.msra.mxu0 %v109
    %395 = vmatprep.subr.mxu0 %v106
    %396 = vmatpush1.msra.mxu0 %v105
    %397 = vmatprep.subr.mxu0 %v102
    %398 = vmatpush1.msra.mxu0 %v101
    %399 = vmatprep.subr.mxu0 %v98
    %400 = vmatpush1.msra.mxu0 %v97
    %401 = vmatprep.subr.mxu0 %v94
    %402 = vmatpush1.msra.mxu0 %v93
    %403 = vmatprep.subr.mxu0 %v90
    %404 = vmatpush1.msra.mxu0 %v89
    %405 = vmatprep.subr.mxu0 %v86
    %406 = vmatpush1.msra.mxu0 %v85
    %407 = vmatprep.subr.mxu0 %v82
    %408 = vmatpush1.msra.mxu0 %v81
    %409 = vmatprep.subr.mxu0 %v78
    %410 = vmatpush1.msra.mxu0 %v77
    %411 = vmatprep.subr.mxu0 %v74
    %412 = vmatpush1.msra.mxu0 %v73
    %413 = vmatprep.subr.mxu0 0.0
    %414 = vmatpush2.msra.mxu0 0.0
    %415 = vmatprep.subr.mxu0 0.0
    %416 = vmatpush2.msra.mxu0 0.0
    %417 = vmatprep.subr.mxu0 0.0
    %418 = vmatpush2.msra.mxu0 0.0
    %419 = vmatprep.subr.mxu0 0.0
    %420 = vmatpush2.msra.mxu0 0.0
    %421 = vmatprep.subr.mxu0 0.0
    %422 = vmatpush2.msra.mxu0 0.0
    %423 = vmatprep.subr.mxu0 0.0
    %424 = vmatpush2.msra.mxu0 0.0
    %425 = vmatprep.subr.mxu0 0.0
    %426 = vmatpush2.msra.mxu0 0.0
    %427 = vmatprep.subr.mxu0 0.0
    %428 = vmatpush2.msra.mxu0 0.0
    %429 = vmatprep.subr.mxu0 0.0
    %430 = vmatpush2.msra.mxu0 0.0
    %431 = vmatprep.subr.mxu0 0.0
    %432 = vmatpush2.msra.mxu0 0.0
    %433 = vmatprep.subr.mxu0 0.0
    %434 = vmatpush2.msra.mxu0 0.0
    %435 = vmatprep.subr.mxu0 0.0
    %436 = vmatpush2.msra.mxu0 0.0
    %437 = vmatprep.subr.mxu0 0.0
    %438 = vmatpush2.msra.mxu0 0.0
    %439 = vmatprep.subr.mxu0 0.0
    %440 = vmatpush2.msra.mxu0 0.0
    %441 = vmatprep.subr.mxu0 0.0
    %442 = vmatpush2.msra.mxu0 0.0
    %443 = vmatprep.subr.mxu0 0.0
    %444 = vmatpush2.msra.mxu0 0.0
    %445 = vmatprep.mubr.f32.mxu0 0.0
    %446 = vmatmul.mubr.f32.gmra.mxu0 %v304
    %v447 = vpop.f32.mrf.mxu0
    %v448 = vadd.f32 0.0, %v447
    %v449 = vpop.f32.mrf.mxu0
    %v450 = vadd.f32 0.0, %v449
    %451 = vdwg.mxu0
    %v452 = vadd.f32 %v306, %v377
    %v453 = vadd.f32 %v307, %v379
    %v454 = vadd.f32 %v308, %v448
    %v455 = vadd.f32 %v309, %v450
    %v456 = vxor.u32 %v452, 2147483648
    %v457 = vmul.f32 %v456, 1.442695
    %v458 = vpow.pop %v457
    %v459 = vadd.f32 %v458, 1.0
    %v460 = vrcp.pop %v459
    %v461 = vmul.f32 1.0, %v460
    %v462 = vxor.u32 %v453, 2147483648
    %v463 = vmul.f32 %v462, 1.442695
    %v464 = vpow.pop %v463
    %v465 = vadd.f32 %v464, 1.0
    %v466 = vrcp.pop %v465
    %v467 = vmul.f32 1.0, %v466
    %v468 = vtanh.pop %v454
    %v469 = vxor.u32 %v455, 2147483648
    %v470 = vmul.f32 %v469, 1.442695
    %v471 = vpow.pop %v470
    %v472 = vadd.f32 %v471, 1.0
    %v473 = vrcp.pop %v472
    %v474 = vmul.f32 1.0, %v473
    %v475 = vmul.f32 %v467, %v302
    %v476 = vmul.f32 %v461, %v468
    %v477 = vadd.f32 %v475, %v476
    %v478 = vtanh.pop %v477
    %v479 = vmul.f32 %v474, %v478
    %s480 = scalar_lea.vmem [#allocation4], 64
    %v481 = vld [vmem:[%s480] sm:$0xff]
    %v482 = vld [vmem:[%s480 + $0x8] sm:$0xff]
    %v483 = vld [vmem:[%s480 + $0x10] sm:$0xff]
    %v484 = vld [vmem:[%s480 + $0x18] sm:$0xff]
    %485 = vmatprep.subr.mxu0 %v132
    %486 = vmatpush1.msra.mxu0 %v131
    %487 = vmatprep.subr.mxu0 %v128
    %488 = vmatpush1.msra.mxu0 %v127
    %489 = vmatprep.subr.mxu0 %v124
    %490 = vmatpush1.msra.mxu0 %v123
    %491 = vmatprep.subr.mxu0 %v120
    %492 = vmatpush1.msra.mxu0 %v119
    %493 = vmatprep.subr.mxu0 %v116
    %494 = vmatpush1.msra.mxu0 %v115
    %495 = vmatprep.subr.mxu0 %v112
    %496 = vmatpush1.msra.mxu0 %v111
    %497 = vmatprep.subr.mxu0 %v108
    %498 = vmatpush1.msra.mxu0 %v107
    %499 = vmatprep.subr.mxu0 %v104
    %500 = vmatpush1.msra.mxu0 %v103
    %501 = vmatprep.subr.mxu0 %v100
    %502 = vmatpush1.msra.mxu0 %v99
    %503 = vmatprep.subr.mxu0 %v96
    %504 = vmatpush1.msra.mxu0 %v95
    %505 = vmatprep.subr.mxu0 %v92
    %506 = vmatpush1.msra.mxu0 %v91
    %507 = vmatprep.subr.mxu0 %v88
    %508 = vmatpush1.msra.mxu0 %v87
    %509 = vmatprep.subr.mxu0 %v84
    %510 = vmatpush1.msra.mxu0 %v83
    %511 = vmatprep.subr.mxu0 %v80
    %512 = vmatpush1.msra.mxu0 %v79
    %513 = vmatprep.subr.mxu0 %v76
    %514 = vmatpush1.msra.mxu0 %v75
    %515 = vmatprep.subr.mxu0 %v72
    %516 = vmatpush1.msra.mxu0 %v71
    %517 = vmatprep.subr.mxu0 0.0
    %518 = vmatpush2.msra.mxu0 0.0
    %519 = vmatprep.subr.mxu0 0.0
    %520 = vmatpush2.msra.mxu0 0.0
    %521 = vmatprep.subr.mxu0 0.0
    %522 = vmatpush2.msra.mxu0 0.0
    %523 = vmatprep.subr.mxu0 0.0
    %524 = vmatpush2.msra.mxu0 0.0
    %525 = vmatprep.subr.mxu0 0.0
    %526 = vmatpush2.msra.mxu0 0.0
    %527 = vmatprep.subr.mxu0 0.0
    %528 = vmatpush2.msra.mxu0 0.0
    %529 = vmatprep.subr.mxu0 0.0
    %530 = vmatpush2.msra.mxu0 0.0
    %531 = vmatprep.subr.mxu0 0.0
    %532 = vmatpush2.msra.mxu0 0.0
    %533 = vmatprep.subr.mxu0 0.0
    %534 = vmatpush2.msra.mxu0 0.0
    %535 = vmatprep.subr.mxu0 0.0
    %536 = vmatpush2.msra.mxu0 0.0
    %537 = vmatprep.subr.mxu0 0.0
    %538 = vmatpush2.msra.mxu0 0.0
    %539 = vmatprep.subr.mxu0 0.0
    %540 = vmatpush2.msra.mxu0 0.0
    %541 = vmatprep.subr.mxu0 0.0
    %542 = vmatpush2.msra.mxu0 0.0
    %543 = vmatprep.subr.mxu0 0.0
    %544 = vmatpush2.msra.mxu0 0.0
    %545 = vmatprep.subr.mxu0 0.0
    %546 = vmatpush2.msra.mxu0 0.0
    %547 = vmatprep.subr.mxu0 0.0
    %548 = vmatpush2.msra.mxu0 0.0
    %549 = vmatprep.mubr.f32.mxu0 0.0
    %550 = vmatmul.mubr.f32.gmra.mxu0 %v479
    %v551 = vpop.f32.mrf.mxu0
    %v552 = vadd.f32 0.0, %v551
    %v553 = vpop.f32.mrf.mxu0
    %v554 = vadd.f32 0.0, %v553
    %555 = vdwg.mxu0
    %556 = vmatprep.subr.mxu0 %v134
    %557 = vmatpush1.msra.mxu0 %v133
    %558 = vmatprep.subr.mxu0 %v130
    %559 = vmatpush1.msra.mxu0 %v129
    %560 = vmatprep.subr.mxu0 %v126
    %561 = vmatpush1.msra.mxu0 %v125
    %562 = vmatprep.subr.mxu0 %v122
    %563 = vmatpush1.msra.mxu0 %v121
    %564 = vmatprep.subr.mxu0 %v118
    %565 = vmatpush1.msra.mxu0 %v117
    %566 = vmatprep.subr.mxu0 %v114
    %567 = vmatpush1.msra.mxu0 %v113
    %568 = vmatprep.subr.mxu0 %v110
    %569 = vmatpush1.msra.mxu0 %v109
    %570 = vmatprep.subr.mxu0 %v106
    %571 = vmatpush1.msra.mxu0 %v105
    %572 = vmatprep.subr.mxu0 %v102
    %573 = vmatpush1.msra.mxu0 %v101
    %574 = vmatprep.subr.mxu0 %v98
    %575 = vmatpush1.msra.mxu0 %v97
    %576 = vmatprep.subr.mxu0 %v94
    %577 = vmatpush1.msra.mxu0 %v93
    %578 = vmatprep.subr.mxu0 %v90
    %579 = vmatpush1.msra.mxu0 %v89
    %580 = vmatprep.subr.mxu0 %v86
    %581 = vmatpush1.msra.mxu0 %v85
    %582 = vmatprep.subr.mxu0 %v82
    %583 = vmatpush1.msra.mxu0 %v81
    %584 = vmatprep.subr.mxu0 %v78
    %585 = vmatpush1.msra.mxu0 %v77
    %586 = vmatprep.subr.mxu0 %v74
    %587 = vmatpush1.msra.mxu0 %v73
    %588 = vmatprep.subr.mxu0 0.0
    %589 = vmatpush2.msra.mxu0 0.0
    %590 = vmatprep.subr.mxu0 0.0
    %591 = vmatpush2.msra.mxu0 0.0
    %592 = vmatprep.subr.mxu0 0.0
    %593 = vmatpush2.msra.mxu0 0.0
    %594 = vmatprep.subr.mxu0 0.0
    %595 = vmatpush2.msra.mxu0 0.0
    %596 = vmatprep.subr.mxu0 0.0
    %597 = vmatpush2.msra.mxu0 0.0
    %598 = vmatprep.subr.mxu0 0.0
    %599 = vmatpush2.msra.mxu0 0.0
    %600 = vmatprep.subr.mxu0 0.0
    %601 = vmatpush2.msra.mxu0 0.0
    %602 = vmatprep.subr.mxu0 0.0
    %603 = vmatpush2.msra.mxu0 0.0
    %604 = vmatprep.subr.mxu0 0.0
    %605 = vmatpush2.msra.mxu0 0.0
    %606 = vmatprep.subr.mxu0 0.0
    %607 = vmatpush2.msra.mxu0 0.0
    %608 = vmatprep.subr.mxu0 0.0
    %609 = vmatpush2.msra.mxu0 0.0
    %610 = vmatprep.subr.mxu0 0.0
    %611 = vmatpush2.msra.mxu0 0.0
    %612 = vmatprep.subr.mxu0 0.0
    %613 = vmatpush2.msra.mxu0 0.0
    %614 = vmatprep.subr.mxu0 0.0
    %615 = vmatpush2.msra.mxu0 0.0
    %616 = vmatprep.subr.mxu0 0.0
    %617 = vmatpush2.msra.mxu0 0.0
    %618 = vmatprep.subr.mxu0 0.0
    %619 = vmatpush2.msra.mxu0 0.0
    %620 = vmatprep.mubr.f32.mxu0 0.0
    %621 = vmatmul.mubr.f32.gmra.mxu0 %v479
    %v622 = vpop.f32.mrf.mxu0
    %v623 = vadd.f32 0.0, %v622
    %v624 = vpop.f32.mrf.mxu0
    %v625 = vadd.f32 0.0, %v624
    %626 = vdwg.mxu0
    %v627 = vadd.f32 %v481, %v552
    %v628 = vadd.f32 %v482, %v554
    %v629 = vadd.f32 %v483, %v623
    %v630 = vadd.f32 %v484, %v625
    %v631 = vxor.u32 %v627, 2147483648
    %v632 = vmul.f32 %v631, 1.442695
    %v633 = vpow.pop %v632
    %v634 = vadd.f32 %v633, 1.0
    %v635 = vrcp.pop %v634
    %v636 = vmul.f32 1.0, %v635
    %v637 = vxor.u32 %v628, 2147483648
    %v638 = vmul.f32 %v637, 1.442695
    %v639 = vpow.pop %v638
    %v640 = vadd.f32 %v639, 1.0
    %v641 = vrcp.pop %v640
    %v642 = vmul.f32 1.0, %v641
    %v643 = vtanh.pop %v629
    %v644 = vxor.u32 %v630, 2147483648
    %v645 = vmul.f32 %v644, 1.442695
    %v646 = vpow.pop %v645
    %v647 = vadd.f32 %v646, 1.0
    %v648 = vrcp.pop %v647
    %v649 = vmul.f32 1.0, %v648
    %v650 = vmul.f32 %v642, %v477
    %v651 = vmul.f32 %v636, %v643
    %v652 = vadd.f32 %v650, %v651
    %v653 = vtanh.pop %v652
    %v654 = vmul.f32 %v649, %v653
    %s655 = scalar_lea.vmem [#allocation4], 96
    %v656 = vld [vmem:[%s655] sm:$0xff]
    %v657 = vld [vmem:[%s655 + $0x8] sm:$0xff]
    %v658 = vld [vmem:[%s655 + $0x10] sm:$0xff]
    %v659 = vld [vmem:[%s655 + $0x18] sm:$0xff]
    %660 = vmatprep.subr.mxu0 %v132
    %661 = vmatpush1.msra.mxu0 %v131
    %662 = vmatprep.subr.mxu0 %v128
    %663 = vmatpush1.msra.mxu0 %v127
    %664 = vmatprep.subr.mxu0 %v124
    %665 = vmatpush1.msra.mxu0 %v123
    %666 = vmatprep.subr.mxu0 %v120
    %667 = vmatpush1.msra.mxu0 %v119
    %668 = vmatprep.subr.mxu0 %v116
    %669 = vmatpush1.msra.mxu0 %v115
    %670 = vmatprep.subr.mxu0 %v112
    %671 = vmatpush1.msra.mxu0 %v111
    %672 = vmatprep.subr.mxu0 %v108
    %673 = vmatpush1.msra.mxu0 %v107
    %674 = vmatprep.subr.mxu0 %v104
    %675 = vmatpush1.msra.mxu0 %v103
    %676 = vmatprep.subr.mxu0 %v100
    %677 = vmatpush1.msra.mxu0 %v99
    %678 = vmatprep.subr.mxu0 %v96
    %679 = vmatpush1.msra.mxu0 %v95
    %680 = vmatprep.subr.mxu0 %v92
    %681 = vmatpush1.msra.mxu0 %v91
    %682 = vmatprep.subr.mxu0 %v88
    %683 = vmatpush1.msra.mxu0 %v87
    %684 = vmatprep.subr.mxu0 %v84
    %685 = vmatpush1.msra.mxu0 %v83
    %686 = vmatprep.subr.mxu0 %v80
    %687 = vmatpush1.msra.mxu0 %v79
    %688 = vmatprep.subr.mxu0 %v76
    %689 = vmatpush1.msra.mxu0 %v75
    %690 = vmatprep.subr.mxu0 %v72
    %691 = vmatpush1.msra.mxu0 %v71
    %692 = vmatprep.subr.mxu0 0.0
    %693 = vmatpush2.msra.mxu0 0.0
    %694 = vmatprep.subr.mxu0 0.0
    %695 = vmatpush2.msra.mxu0 0.0
    %696 = vmatprep.subr.mxu0 0.0
    %697 = vmatpush2.msra.mxu0 0.0
    %698 = vmatprep.subr.mxu0 0.0
    %699 = vmatpush2.msra.mxu0 0.0
    %700 = vmatprep.subr.mxu0 0.0
    %701 = vmatpush2.msra.mxu0 0.0
    %702 = vmatprep.subr.mxu0 0.0
    %703 = vmatpush2.msra.mxu0 0.0
    %704 = vmatprep.subr.mxu0 0.0
    %705 = vmatpush2.msra.mxu0 0.0
    %706 = vmatprep.subr.mxu0 0.0
    %707 = vmatpush2.msra.mxu0 0.0
    %708 = vmatprep.subr.mxu0 0.0
    %709 = vmatpush2.msra.mxu0 0.0
    %710 = vmatprep.subr.mxu0 0.0
    %711 = vmatpush2.msra.mxu0 0.0
    %712 = vmatprep.subr.mxu0 0.0
    %713 = vmatpush2.msra.mxu0 0.0
    %714 = vmatprep.subr.mxu0 0.0
    %715 = vmatpush2.msra.mxu0 0.0
    %716 = vmatprep.subr.mxu0 0.0
    %717 = vmatpush2.msra.mxu0 0.0
    %718 = vmatprep.subr.mxu0 0.0
    %719 = vmatpush2.msra.mxu0 0.0
    %720 = vmatprep.subr.mxu0 0.0
    %721 = vmatpush2.msra.mxu0 0.0
    %722 = vmatprep.subr.mxu0 0.0
    %723 = vmatpush2.msra.mxu0 0.0
    %724 = vmatprep.mubr.f32.mxu0 0.0
    %725 = vmatmul.mubr.f32.gmra.mxu0 %v654
    %v726 = vpop.f32.mrf.mxu0
    %v727 = vadd.f32 0.0, %v726
    %v728 = vpop.f32.mrf.mxu0
    %v729 = vadd.f32 0.0, %v728
    %730 = vdwg.mxu0
    %731 = vmatprep.subr.mxu0 %v134
    %732 = vmatpush1.msra.mxu0 %v133
    %733 = vmatprep.subr.mxu0 %v130
    %734 = vmatpush1.msra.mxu0 %v129
    %735 = vmatprep.subr.mxu0 %v126
    %736 = vmatpush1.msra.mxu0 %v125
    %737 = vmatprep.subr.mxu0 %v122
    %738 = vmatpush1.msra.mxu0 %v121
    %739 = vmatprep.subr.mxu0 %v118
    %740 = vmatpush1.msra.mxu0 %v117
    %741 = vmatprep.subr.mxu0 %v114
    %742 = vmatpush1.msra.mxu0 %v113
    %743 = vmatprep.subr.mxu0 %v110
    %744 = vmatpush1.msra.mxu0 %v109
    %745 = vmatprep.subr.mxu0 %v106
    %746 = vmatpush1.msra.mxu0 %v105
    %747 = vmatprep.subr.mxu0 %v102
    %748 = vmatpush1.msra.mxu0 %v101
    %749 = vmatprep.subr.mxu0 %v98
    %750 = vmatpush1.msra.mxu0 %v97
    %751 = vmatprep.subr.mxu0 %v94
    %752 = vmatpush1.msra.mxu0 %v93
    %753 = vmatprep.subr.mxu0 %v90
    %754 = vmatpush1.msra.mxu0 %v89
    %755 = vmatprep.subr.mxu0 %v86
    %756 = vmatpush1.msra.mxu0 %v85
    %757 = vmatprep.subr.mxu0 %v82
    %758 = vmatpush1.msra.mxu0 %v81
    %759 = vmatprep.subr.mxu0 %v78
    %760 = vmatpush1.msra.mxu0 %v77
    %761 = vmatprep.subr.mxu0 %v74
    %762 = vmatpush1.msra.mxu0 %v73
    %763 = vmatprep.subr.mxu0 0.0
    %764 = vmatpush2.msra.mxu0 0.0
    %765 = vmatprep.subr.mxu0 0.0
    %766 = vmatpush2.msra.mxu0 0.0
    %767 = vmatprep.subr.mxu0 0.0
    %768 = vmatpush2.msra.mxu0 0.0
    %769 = vmatprep.subr.mxu0 0.0
    %770 = vmatpush2.msra.mxu0 0.0
    %771 = vmatprep.subr.mxu0 0.0
    %772 = vmatpush2.msra.mxu0 0.0
    %773 = vmatprep.subr.mxu0 0.0
    %774 = vmatpush2.msra.mxu0 0.0
    %775 = vmatprep.subr.mxu0 0.0
    %776 = vmatpush2.msra.mxu0 0.0
    %777 = vmatprep.subr.mxu0 0.0
    %778 = vmatpush2.msra.mxu0 0.0
    %779 = vmatprep.subr.mxu0 0.0
    %780 = vmatpush2.msra.mxu0 0.0
    %781 = vmatprep.subr.mxu0 0.0
    %782 = vmatpush2.msra.mxu0 0.0
    %783 = vmatprep.subr.mxu0 0.0
    %784 = vmatpush2.msra.mxu0 0.0
    %785 = vmatprep.subr.mxu0 0.0
    %786 = vmatpush2.msra.mxu0 0.0
    %787 = vmatprep.subr.mxu0 0.0
    %788 = vmatpush2.msra.mxu0 0.0
    %789 = vmatprep.subr.mxu0 0.0
    %790 = vmatpush2.msra.mxu0 0.0
    %791 = vmatprep.subr.mxu0 0.0
    %792 = vmatpush2.msra.mxu0 0.0
    %793 = vmatprep.subr.mxu0 0.0
    %794 = vmatpush2.msra.mxu0 0.0
    %795 = vmatprep.mubr.f32.mxu0 0.0
    %796 = vmatmul.mubr.f32.gmra.mxu0 %v654
    %v797 = vpop.f32.mrf.mxu0
    %v798 = vadd.f32 0.0, %v797
    %v799 = vpop.f32.mrf.mxu0
    %v800 = vadd.f32 0.0, %v799
    %801 = vdwg.mxu0
    %v802 = vadd.f32 %v656, %v727
    %v803 = vadd.f32 %v657, %v729
    %v804 = vadd.f32 %v658, %v798
    %v805 = vadd.f32 %v659, %v800
    %v806 = vxor.u32 %v802, 2147483648
    %v807 = vmul.f32 %v806, 1.442695
    %v808 = vpow.pop %v807
    %v809 = vadd.f32 %v808, 1.0
    %v810 = vrcp.pop %v809
    %v811 = vmul.f32 1.0, %v810
    %v812 = vxor.u32 %v803, 2147483648
    %v813 = vmul.f32 %v812, 1.442695
    %v814 = vpow.pop %v813
    %v815 = vadd.f32 %v814, 1.0
    %v816 = vrcp.pop %v815
    %v817 = vmul.f32 1.0, %v816
    %v818 = vtanh.pop %v804
    %v819 = vxor.u32 %v805, 2147483648
    %v820 = vmul.f32 %v819, 1.442695
    %v821 = vpow.pop %v820
    %v822 = vadd.f32 %v821, 1.0
    %v823 = vrcp.pop %v822
    %v824 = vmul.f32 1.0, %v823
    %v825 = vmul.f32 %v817, %v652
    %v826 = vmul.f32 %v811, %v818
    %v827 = vadd.f32 %v825, %v826
    %v828 = vtanh.pop %v827
    %v829 = vmul.f32 %v824, %v828
    %s830 = scalar_lea.vmem [#allocation4], 128
    %v831 = vld [vmem:[%s830] sm:$0xff]
    %v832 = vld [vmem:[%s830 + $0x8] sm:$0xff]
    %v833 = vld [vmem:[%s830 + $0x10] sm:$0xff]
    %v834 = vld [vmem:[%s830 + $0x18] sm:$0xff]
    %835 = vmatprep.subr.mxu0 %v132
    %836 = vmatpush1.msra.mxu0 %v131
    %837 = vmatprep.subr.mxu0 %v128
    %838 = vmatpush1.msra.mxu0 %v127
    %839 = vmatprep.subr.mxu0 %v124
    %840 = vmatpush1.msra.mxu0 %v123
    %841 = vmatprep.subr.mxu0 %v120
    %842 = vmatpush1.msra.mxu0 %v119
    %843 = vmatprep.subr.mxu0 %v116
    %844 = vmatpush1.msra.mxu0 %v115
    %845 = vmatprep.subr.mxu0 %v112
    %846 = vmatpush1.msra.mxu0 %v111
    %847 = vmatprep.subr.mxu0 %v108
    %848 = vmatpush1.msra.mxu0 %v107
    %849 = vmatprep.subr.mxu0 %v104
    %850 = vmatpush1.msra.mxu0 %v103
    %851 = vmatprep.subr.mxu0 %v100
    %852 = vmatpush1.msra.mxu0 %v99
    %853 = vmatprep.subr.mxu0 %v96
    %854 = vmatpush1.msra.mxu0 %v95
    %855 = vmatprep.subr.mxu0 %v92
    %856 = vmatpush1.msra.mxu0 %v91
    %857 = vmatprep.subr.mxu0 %v88
    %858 = vmatpush1.msra.mxu0 %v87
    %859 = vmatprep.subr.mxu0 %v84
    %860 = vmatpush1.msra.mxu0 %v83
    %861 = vmatprep.subr.mxu0 %v80
    %862 = vmatpush1.msra.mxu0 %v79
    %863 = vmatprep.subr.mxu0 %v76
    %864 = vmatpush1.msra.mxu0 %v75
    %865 = vmatprep.subr.mxu0 %v72
    %866 = vmatpush1.msra.mxu0 %v71
    %867 = vmatprep.subr.mxu0 0.0
    %868 = vmatpush2.msra.mxu0 0.0
    %869 = vmatprep.subr.mxu0 0.0
    %870 = vmatpush2.msra.mxu0 0.0
    %871 = vmatprep.subr.mxu0 0.0
    %872 = vmatpush2.msra.mxu0 0.0
    %873 = vmatprep.subr.mxu0 0.0
    %874 = vmatpush2.msra.mxu0 0.0
    %875 = vmatprep.subr.mxu0 0.0
    %876 = vmatpush2.msra.mxu0 0.0
    %877 = vmatprep.subr.mxu0 0.0
    %878 = vmatpush2.msra.mxu0 0.0
    %879 = vmatprep.subr.mxu0 0.0
    %880 = vmatpush2.msra.mxu0 0.0
    %881 = vmatprep.subr.mxu0 0.0
    %882 = vmatpush2.msra.mxu0 0.0
    %883 = vmatprep.subr.mxu0 0.0
    %884 = vmatpush2.msra.mxu0 0.0
    %885 = vmatprep.subr.mxu0 0.0
    %886 = vmatpush2.msra.mxu0 0.0
    %887 = vmatprep.subr.mxu0 0.0
    %888 = vmatpush2.msra.mxu0 0.0
    %889 = vmatprep.subr.mxu0 0.0
    %890 = vmatpush2.msra.mxu0 0.0
    %891 = vmatprep.subr.mxu0 0.0
    %892 = vmatpush2.msra.mxu0 0.0
    %893 = vmatprep.subr.mxu0 0.0
    %894 = vmatpush2.msra.mxu0 0.0
    %895 = vmatprep.subr.mxu0 0.0
    %896 = vmatpush2.msra.mxu0 0.0
    %897 = vmatprep.subr.mxu0 0.0
    %898 = vmatpush2.msra.mxu0 0.0
    %899 = vmatprep.mubr.f32.mxu0 0.0
    %900 = vmatmul.mubr.f32.gmra.mxu0 %v829
    %v901 = vpop.f32.mrf.mxu0
    %v902 = vadd.f32 0.0, %v901
    %v903 = vpop.f32.mrf.mxu0
    %v904 = vadd.f32 0.0, %v903
    %905 = vdwg.mxu0
    %906 = vmatprep.subr.mxu0 %v134
    %907 = vmatpush1.msra.mxu0 %v133
    %908 = vmatprep.subr.mxu0 %v130
    %909 = vmatpush1.msra.mxu0 %v129
    %910 = vmatprep.subr.mxu0 %v126
    %911 = vmatpush1.msra.mxu0 %v125
    %912 = vmatprep.subr.mxu0 %v122
    %913 = vmatpush1.msra.mxu0 %v121
    %914 = vmatprep.subr.mxu0 %v118
    %915 = vmatpush1.msra.mxu0 %v117
    %916 = vmatprep.subr.mxu0 %v114
    %917 = vmatpush1.msra.mxu0 %v113
    %918 = vmatprep.subr.mxu0 %v110
    %919 = vmatpush1.msra.mxu0 %v109
    %920 = vmatprep.subr.mxu0 %v106
    %921 = vmatpush1.msra.mxu0 %v105
    %922 = vmatprep.subr.mxu0 %v102
    %923 = vmatpush1.msra.mxu0 %v101
    %924 = vmatprep.subr.mxu0 %v98
    %925 = vmatpush1.msra.mxu0 %v97
    %926 = vmatprep.subr.mxu0 %v94
    %927 = vmatpush1.msra.mxu0 %v93
    %928 = vmatprep.subr.mxu0 %v90
    %929 = vmatpush1.msra.mxu0 %v89
    %930 = vmatprep.subr.mxu0 %v86
    %931 = vmatpush1.msra.mxu0 %v85
    %932 = vmatprep.subr.mxu0 %v82
    %933 = vmatpush1.msra.mxu0 %v81
    %934 = vmatprep.subr.mxu0 %v78
    %935 = vmatpush1.msra.mxu0 %v77
    %936 = vmatprep.subr.mxu0 %v74
    %937 = vmatpush1.msra.mxu0 %v73
    %938 = vmatprep.subr.mxu0 0.0
    %939 = vmatpush2.msra.mxu0 0.0
    %940 = vmatprep.subr.mxu0 0.0
    %941 = vmatpush2.msra.mxu0 0.0
    %942 = vmatprep.subr.mxu0 0.0
    %943 = vmatpush2.msra.mxu0 0.0
    %944 = vmatprep.subr.mxu0 0.0
    %945 = vmatpush2.msra.mxu0 0.0
    %946 = vmatprep.subr.mxu0 0.0
    %947 = vmatpush2.msra.mxu0 0.0
    %948 = vmatprep.subr.mxu0 0.0
    %949 = vmatpush2.msra.mxu0 0.0
    %950 = vmatprep.subr.mxu0 0.0
    %951 = vmatpush2.msra.mxu0 0.0
    %952 = vmatprep.subr.mxu0 0.0
    %953 = vmatpush2.msra.mxu0 0.0
    %954 = vmatprep.subr.mxu0 0.0
    %955 = vmatpush2.msra.mxu0 0.0
    %956 = vmatprep.subr.mxu0 0.0
    %957 = vmatpush2.msra.mxu0 0.0
    %958 = vmatprep.subr.mxu0 0.0
    %959 = vmatpush2.msra.mxu0 0.0
    %960 = vmatprep.subr.mxu0 0.0
    %961 = vmatpush2.msra.mxu0 0.0
    %962 = vmatprep.subr.mxu0 0.0
    %963 = vmatpush2.msra.mxu0 0.0
    %964 = vmatprep.subr.mxu0 0.0
    %965 = vmatpush2.msra.mxu0 0.0
    %966 = vmatprep.subr.mxu0 0.0
    %967 = vmatpush2.msra.mxu0 0.0
    %968 = vmatprep.subr.mxu0 0.0
    %969 = vmatpush2.msra.mxu0 0.0
    %970 = vmatprep.mubr.f32.mxu0 0.0
    %971 = vmatmul.mubr.f32.gmra.mxu0 %v829
    %v972 = vpop.f32.mrf.mxu0
    %v973 = vadd.f32 0.0, %v972
    %v974 = vpop.f32.mrf.mxu0
    %v975 = vadd.f32 0.0, %v974
    %976 = vdwg.mxu0
    %v977 = vadd.f32 %v831, %v902
    %v978 = vadd.f32 %v832, %v904
    %v979 = vadd.f32 %v833, %v973
    %v980 = vadd.f32 %v834, %v975
    %v981 = vxor.u32 %v977, 2147483648
    %v982 = vmul.f32 %v981, 1.442695
    %v983 = vpow.pop %v982
    %v984 = vadd.f32 %v983, 1.0
    %v985 = vrcp.pop %v984
    %v986 = vmul.f32 1.0, %v985
    %v987 = vxor.u32 %v978, 2147483648
    %v988 = vmul.f32 %v987, 1.442695
    %v989 = vpow.pop %v988
    %v990 = vadd.f32 %v989, 1.0
    %v991 = vrcp.pop %v990
    %v992 = vmul.f32 1.0, %v991
    %v993 = vtanh.pop %v979
    %v994 = vxor.u32 %v980, 2147483648
    %v995 = vmul.f32 %v994, 1.442695
    %v996 = vpow.pop %v995
    %v997 = vadd.f32 %v996, 1.0
    %v998 = vrcp.pop %v997
    %v999 = vmul.f32 1.0, %v998
    %v1000 = vmul.f32 %v992, %v827
    %v1001 = vmul.f32 %v986, %v993
    %v1002 = vadd.f32 %v1000, %v1001
    %v1003 = vtanh.pop %v1002
    %v1004 = vmul.f32 %v999, %v1003
    %s1005 = scalar_lea.vmem [#allocation4], 160
    %v1006 = vld [vmem:[%s1005] sm:$0xff]
    %v1007 = vld [vmem:[%s1005 + $0x8] sm:$0xff]
    %v1008 = vld [vmem:[%s1005 + $0x10] sm:$0xff]
    %v1009 = vld [vmem:[%s1005 + $0x18] sm:$0xff]
    %1010 = vmatprep.subr.mxu0 %v132
    %1011 = vmatpush1.msra.mxu0 %v131
    %1012 = vmatprep.subr.mxu0 %v128
    %1013 = vmatpush1.msra.mxu0 %v127
    %1014 = vmatprep.subr.mxu0 %v124
    %1015 = vmatpush1.msra.mxu0 %v123
    %1016 = vmatprep.subr.mxu0 %v120
    %1017 = vmatpush1.msra.mxu0 %v119
    %1018 = vmatprep.subr.mxu0 %v116
    %1019 = vmatpush1.msra.mxu0 %v115
    %1020 = vmatprep.subr.mxu0 %v112
    %1021 = vmatpush1.msra.mxu0 %v111
    %1022 = vmatprep.subr.mxu0 %v108
    %1023 = vmatpush1.msra.mxu0 %v107
    %1024 = vmatprep.subr.mxu0 %v104
    %1025 = vmatpush1.msra.mxu0 %v103
    %1026 = vmatprep.subr.mxu0 %v100
    %1027 = vmatpush1.msra.mxu0 %v99
    %1028 = vmatprep.subr.mxu0 %v96
    %1029 = vmatpush1.msra.mxu0 %v95
    %1030 = vmatprep.subr.mxu0 %v92
    %1031 = vmatpush1.msra.mxu0 %v91
    %1032 = vmatprep.subr.mxu0 %v88
    %1033 = vmatpush1.msra.mxu0 %v87
    %1034 = vmatprep.subr.mxu0 %v84
    %1035 = vmatpush1.msra.mxu0 %v83
    %1036 = vmatprep.subr.mxu0 %v80
    %1037 = vmatpush1.msra.mxu0 %v79
    %1038 = vmatprep.subr.mxu0 %v76
    %1039 = vmatpush1.msra.mxu0 %v75
    %1040 = vmatprep.subr.mxu0 %v72
    %1041 = vmatpush1.msra.mxu0 %v71
    %1042 = vmatprep.subr.mxu0 0.0
    %1043 = vmatpush2.msra.mxu0 0.0
    %1044 = vmatprep.subr.mxu0 0.0
    %1045 = vmatpush2.msra.mxu0 0.0
    %1046 = vmatprep.subr.mxu0 0.0
    %1047 = vmatpush2.msra.mxu0 0.0
    %1048 = vmatprep.subr.mxu0 0.0
    %1049 = vmatpush2.msra.mxu0 0.0
    %1050 = vmatprep.subr.mxu0 0.0
    %1051 = vmatpush2.msra.mxu0 0.0
    %1052 = vmatprep.subr.mxu0 0.0
    %1053 = vmatpush2.msra.mxu0 0.0
    %1054 = vmatprep.subr.mxu0 0.0
    %1055 = vmatpush2.msra.mxu0 0.0
    %1056 = vmatprep.subr.mxu0 0.0
    %1057 = vmatpush2.msra.mxu0 0.0
    %1058 = vmatprep.subr.mxu0 0.0
    %1059 = vmatpush2.msra.mxu0 0.0
    %1060 = vmatprep.subr.mxu0 0.0
    %1061 = vmatpush2.msra.mxu0 0.0
    %1062 = vmatprep.subr.mxu0 0.0
    %1063 = vmatpush2.msra.mxu0 0.0
    %1064 = vmatprep.subr.mxu0 0.0
    %1065 = vmatpush2.msra.mxu0 0.0
    %1066 = vmatprep.subr.mxu0 0.0
    %1067 = vmatpush2.msra.mxu0 0.0
    %1068 = vmatprep.subr.mxu0 0.0
    %1069 = vmatpush2.msra.mxu0 0.0
    %1070 = vmatprep.subr.mxu0 0.0
    %1071 = vmatpush2.msra.mxu0 0.0
    %1072 = vmatprep.subr.mxu0 0.0
    %1073 = vmatpush2.msra.mxu0 0.0
    %1074 = vmatprep.mubr.f32.mxu0 0.0
    %1075 = vmatmul.mubr.f32.gmra.mxu0 %v1004
    %v1076 = vpop.f32.mrf.mxu0
    %v1077 = vadd.f32 0.0, %v1076
    %v1078 = vpop.f32.mrf.mxu0
    %v1079 = vadd.f32 0.0, %v1078
    %1080 = vdwg.mxu0
    %1081 = vmatprep.subr.mxu0 %v134
    %1082 = vmatpush1.msra.mxu0 %v133
    %1083 = vmatprep.subr.mxu0 %v130
    %1084 = vmatpush1.msra.mxu0 %v129
    %1085 = vmatprep.subr.mxu0 %v126
    %1086 = vmatpush1.msra.mxu0 %v125
    %1087 = vmatprep.subr.mxu0 %v122
    %1088 = vmatpush1.msra.mxu0 %v121
    %1089 = vmatprep.subr.mxu0 %v118
    %1090 = vmatpush1.msra.mxu0 %v117
    %1091 = vmatprep.subr.mxu0 %v114
    %1092 = vmatpush1.msra.mxu0 %v113
    %1093 = vmatprep.subr.mxu0 %v110
    %1094 = vmatpush1.msra.mxu0 %v109
    %1095 = vmatprep.subr.mxu0 %v106
    %1096 = vmatpush1.msra.mxu0 %v105
    %1097 = vmatprep.subr.mxu0 %v102
    %1098 = vmatpush1.msra.mxu0 %v101
    %1099 = vmatprep.subr.mxu0 %v98
    %1100 = vmatpush1.msra.mxu0 %v97
    %1101 = vmatprep.subr.mxu0 %v94
    %1102 = vmatpush1.msra.mxu0 %v93
    %1103 = vmatprep.subr.mxu0 %v90
    %1104 = vmatpush1.msra.mxu0 %v89
    %1105 = vmatprep.subr.mxu0 %v86
    %1106 = vmatpush1.msra.mxu0 %v85
    %1107 = vmatprep.subr.mxu0 %v82
    %1108 = vmatpush1.msra.mxu0 %v81
    %1109 = vmatprep.subr.mxu0 %v78
    %1110 = vmatpush1.msra.mxu0 %v77
    %1111 = vmatprep.subr.mxu0 %v74
    %1112 = vmatpush1.msra.mxu0 %v73
    %1113 = vmatprep.subr.mxu0 0.0
    %1114 = vmatpush2.msra.mxu0 0.0
    %1115 = vmatprep.subr.mxu0 0.0
    %1116 = vmatpush2.msra.mxu0 0.0
    %1117 = vmatprep.subr.mxu0 0.0
    %1118 = vmatpush2.msra.mxu0 0.0
    %1119 = vmatprep.subr.mxu0 0.0
    %1120 = vmatpush2.msra.mxu0 0.0
    %1121 = vmatprep.subr.mxu0 0.0
    %1122 = vmatpush2.msra.mxu0 0.0
    %1123 = vmatprep.subr.mxu0 0.0
    %1124 = vmatpush2.msra.mxu0 0.0
    %1125 = vmatprep.subr.mxu0 0.0
    %1126 = vmatpush2.msra.mxu0 0.0
    %1127 = vmatprep.subr.mxu0 0.0
    %1128 = vmatpush2.msra.mxu0 0.0
    %1129 = vmatprep.subr.mxu0 0.0
    %1130 = vmatpush2.msra.mxu0 0.0
    %1131 = vmatprep.subr.mxu0 0.0
    %1132 = vmatpush2.msra.mxu0 0.0
    %1133 = vmatprep.subr.mxu0 0.0
    %1134 = vmatpush2.msra.mxu0 0.0
    %1135 = vmatprep.subr.mxu0 0.0
    %1136 = vmatpush2.msra.mxu0 0.0
    %1137 = vmatprep.subr.mxu0 0.0
    %1138 = vmatpush2.msra.mxu0 0.0
    %1139 = vmatprep.subr.mxu0 0.0
    %1140 = vmatpush2.msra.mxu0 0.0
    %1141 = vmatprep.subr.mxu0 0.0
    %1142 = vmatpush2.msra.mxu0 0.0
    %1143 = vmatprep.subr.mxu0 0.0
    %1144 = vmatpush2.msra.mxu0 0.0
    %1145 = vmatprep.mubr.f32.mxu0 0.0
    %1146 = vmatmul.mubr.f32.gmra.mxu0 %v1004
    %v1147 = vpop.f32.mrf.mxu0
    %v1148 = vadd.f32 0.0, %v1147
    %v1149 = vpop.f32.mrf.mxu0
    %v1150 = vadd.f32 0.0, %v1149
    %1151 = vdwg.mxu0
    %v1152 = vadd.f32 %v1006, %v1077
    %v1153 = vadd.f32 %v1007, %v1079
    %v1154 = vadd.f32 %v1008, %v1148
    %v1155 = vadd.f32 %v1009, %v1150
    %v1156 = vxor.u32 %v1152, 2147483648
    %v1157 = vmul.f32 %v1156, 1.442695
    %v1158 = vpow.pop %v1157
    %v1159 = vadd.f32 %v1158, 1.0
    %v1160 = vrcp.pop %v1159
    %v1161 = vmul.f32 1.0, %v1160
    %v1162 = vxor.u32 %v1153, 2147483648
    %v1163 = vmul.f32 %v1162, 1.442695
    %v1164 = vpow.pop %v1163
    %v1165 = vadd.f32 %v1164, 1.0
    %v1166 = vrcp.pop %v1165
    %v1167 = vmul.f32 1.0, %v1166
    %v1168 = vtanh.pop %v1154
    %v1169 = vxor.u32 %v1155, 2147483648
    %v1170 = vmul.f32 %v1169, 1.442695
    %v1171 = vpow.pop %v1170
    %v1172 = vadd.f32 %v1171, 1.0
    %v1173 = vrcp.pop %v1172
    %v1174 = vmul.f32 1.0, %v1173
    %v1175 = vmul.f32 %v1167, %v1002
    %v1176 = vmul.f32 %v1161, %v1168
    %v1177 = vadd.f32 %v1175, %v1176
    %v1178 = vtanh.pop %v1177
    %v1179 = vmul.f32 %v1174, %v1178
    %s1180 = scalar_lea.vmem [#allocation4], 192
    %v1181 = vld [vmem:[%s1180] sm:$0xff]
    %v1182 = vld [vmem:[%s1180 + $0x8] sm:$0xff]
    %v1183 = vld [vmem:[%s1180 + $0x10] sm:$0xff]
    %v1184 = vld [vmem:[%s1180 + $0x18] sm:$0xff]
    %1185 = vmatprep.subr.mxu0 %v132
    %1186 = vmatpush1.msra.mxu0 %v131
    %1187 = vmatprep.subr.mxu0 %v128
    %1188 = vmatpush1.msra.mxu0 %v127
    %1189 = vmatprep.subr.mxu0 %v124
    %1190 = vmatpush1.msra.mxu0 %v123
    %1191 = vmatprep.subr.mxu0 %v120
    %1192 = vmatpush1.msra.mxu0 %v119
    %1193 = vmatprep.subr.mxu0 %v116
    %1194 = vmatpush1.msra.mxu0 %v115
    %1195 = vmatprep.subr.mxu0 %v112
    %1196 = vmatpush1.msra.mxu0 %v111
    %1197 = vmatprep.subr.mxu0 %v108
    %1198 = vmatpush1.msra.mxu0 %v107
    %1199 = vmatprep.subr.mxu0 %v104
    %1200 = vmatpush1.msra.mxu0 %v103
    %1201 = vmatprep.subr.mxu0 %v100
    %1202 = vmatpush1.msra.mxu0 %v99
    %1203 = vmatprep.subr.mxu0 %v96
    %1204 = vmatpush1.msra.mxu0 %v95
    %1205 = vmatprep.subr.mxu0 %v92
    %1206 = vmatpush1.msra.mxu0 %v91
    %1207 = vmatprep.subr.mxu0 %v88
    %1208 = vmatpush1.msra.mxu0 %v87
    %1209 = vmatprep.subr.mxu0 %v84
    %1210 = vmatpush1.msra.mxu0 %v83
    %1211 = vmatprep.subr.mxu0 %v80
    %1212 = vmatpush1.msra.mxu0 %v79
    %1213 = vmatprep.subr.mxu0 %v76
    %1214 = vmatpush1.msra.mxu0 %v75
    %1215 = vmatprep.subr.mxu0 %v72
    %1216 = vmatpush1.msra.mxu0 %v71
    %1217 = vmatprep.subr.mxu0 0.0
    %1218 = vmatpush2.msra.mxu0 0.0
    %1219 = vmatprep.subr.mxu0 0.0
    %1220 = vmatpush2.msra.mxu0 0.0
    %1221 = vmatprep.subr.mxu0 0.0
    %1222 = vmatpush2.msra.mxu0 0.0
    %1223 = vmatprep.subr.mxu0 0.0
    %1224 = vmatpush2.msra.mxu0 0.0
    %1225 = vmatprep.subr.mxu0 0.0
    %1226 = vmatpush2.msra.mxu0 0.0
    %1227 = vmatprep.subr.mxu0 0.0
    %1228 = vmatpush2.msra.mxu0 0.0
    %1229 = vmatprep.subr.mxu0 0.0
    %1230 = vmatpush2.msra.mxu0 0.0
    %1231 = vmatprep.subr.mxu0 0.0
    %1232 = vmatpush2.msra.mxu0 0.0
    %1233 = vmatprep.subr.mxu0 0.0
    %1234 = vmatpush2.msra.mxu0 0.0
    %1235 = vmatprep.subr.mxu0 0.0
    %1236 = vmatpush2.msra.mxu0 0.0
    %1237 = vmatprep.subr.mxu0 0.0
    %1238 = vmatpush2.msra.mxu0 0.0
    %1239 = vmatprep.subr.mxu0 0.0
    %1240 = vmatpush2.msra.mxu0 0.0
    %1241 = vmatprep.subr.mxu0 0.0
    %1242 = vmatpush2.msra.mxu0 0.0
    %1243 = vmatprep.subr.mxu0 0.0
    %1244 = vmatpush2.msra.mxu0 0.0
    %1245 = vmatprep.subr.mxu0 0.0
    %1246 = vmatpush2.msra.mxu0 0.0
    %1247 = vmatprep.subr.mxu0 0.0
    %1248 = vmatpush2.msra.mxu0 0.0
    %1249 = vmatprep.mubr.f32.mxu0 0.0
    %1250 = vmatmul.mubr.f32.gmra.mxu0 %v1179
    %v1251 = vpop.f32.mrf.mxu0
    %v1252 = vadd.f32 0.0, %v1251
    %v1253 = vpop.f32.mrf.mxu0
    %v1254 = vadd.f32 0.0, %v1253
    %1255 = vdwg.mxu0
    %1256 = vmatprep.subr.mxu0 %v134
    %1257 = vmatpush1.msra.mxu0 %v133
    %1258 = vmatprep.subr.mxu0 %v130
    %1259 = vmatpush1.msra.mxu0 %v129
    %1260 = vmatprep.subr.mxu0 %v126
    %1261 = vmatpush1.msra.mxu0 %v125
    %1262 = vmatprep.subr.mxu0 %v122
    %1263 = vmatpush1.msra.mxu0 %v121
    %1264 = vmatprep.subr.mxu0 %v118
    %1265 = vmatpush1.msra.mxu0 %v117
    %1266 = vmatprep.subr.mxu0 %v114
    %1267 = vmatpush1.msra.mxu0 %v113
    %1268 = vmatprep.subr.mxu0 %v110
    %1269 = vmatpush1.msra.mxu0 %v109
    %1270 = vmatprep.subr.mxu0 %v106
    %1271 = vmatpush1.msra.mxu0 %v105
    %1272 = vmatprep.subr.mxu0 %v102
    %1273 = vmatpush1.msra.mxu0 %v101
    %1274 = vmatprep.subr.mxu0 %v98
    %1275 = vmatpush1.msra.mxu0 %v97
    %1276 = vmatprep.subr.mxu0 %v94
    %1277 = vmatpush1.msra.mxu0 %v93
    %1278 = vmatprep.subr.mxu0 %v90
    %1279 = vmatpush1.msra.mxu0 %v89
    %1280 = vmatprep.subr.mxu0 %v86
    %1281 = vmatpush1.msra.mxu0 %v85
    %1282 = vmatprep.subr.mxu0 %v82
    %1283 = vmatpush1.msra.mxu0 %v81
    %1284 = vmatprep.subr.mxu0 %v78
    %1285 = vmatpush1.msra.mxu0 %v77
    %1286 = vmatprep.subr.mxu0 %v74
    %1287 = vmatpush1.msra.mxu0 %v73
    %1288 = vmatprep.subr.mxu0 0.0
    %1289 = vmatpush2.msra.mxu0 0.0
    %1290 = vmatprep.subr.mxu0 0.0
    %1291 = vmatpush2.msra.mxu0 0.0
    %1292 = vmatprep.subr.mxu0 0.0
    %1293 = vmatpush2.msra.mxu0 0.0
    %1294 = vmatprep.subr.mxu0 0.0
    %1295 = vmatpush2.msra.mxu0 0.0
    %1296 = vmatprep.subr.mxu0 0.0
    %1297 = vmatpush2.msra.mxu0 0.0
    %1298 = vmatprep.subr.mxu0 0.0
    %1299 = vmatpush2.msra.mxu0 0.0
    %1300 = vmatprep.subr.mxu0 0.0
    %1301 = vmatpush2.msra.mxu0 0.0
    %1302 = vmatprep.subr.mxu0 0.0
    %1303 = vmatpush2.msra.mxu0 0.0
    %1304 = vmatprep.subr.mxu0 0.0
    %1305 = vmatpush2.msra.mxu0 0.0
    %1306 = vmatprep.subr.mxu0 0.0
    %1307 = vmatpush2.msra.mxu0 0.0
    %1308 = vmatprep.subr.mxu0 0.0
    %1309 = vmatpush2.msra.mxu0 0.0
    %1310 = vmatprep.subr.mxu0 0.0
    %1311 = vmatpush2.msra.mxu0 0.0
    %1312 = vmatprep.subr.mxu0 0.0
    %1313 = vmatpush2.msra.mxu0 0.0
    %1314 = vmatprep.subr.mxu0 0.0
    %1315 = vmatpush2.msra.mxu0 0.0
    %1316 = vmatprep.subr.mxu0 0.0
    %1317 = vmatpush2.msra.mxu0 0.0
    %1318 = vmatprep.subr.mxu0 0.0
    %1319 = vmatpush2.msra.mxu0 0.0
    %1320 = vmatprep.mubr.f32.mxu0 0.0
    %1321 = vmatmul.mubr.f32.gmra.mxu0 %v1179
    %v1322 = vpop.f32.mrf.mxu0
    %v1323 = vadd.f32 0.0, %v1322
    %v1324 = vpop.f32.mrf.mxu0
    %v1325 = vadd.f32 0.0, %v1324
    %1326 = vdwg.mxu0
    %v1327 = vadd.f32 %v1181, %v1252
    %v1328 = vadd.f32 %v1182, %v1254
    %v1329 = vadd.f32 %v1183, %v1323
    %v1330 = vadd.f32 %v1184, %v1325
    %v1331 = vxor.u32 %v1327, 2147483648
    %v1332 = vmul.f32 %v1331, 1.442695
    %v1333 = vpow.pop %v1332
    %v1334 = vadd.f32 %v1333, 1.0
    %v1335 = vrcp.pop %v1334
    %v1336 = vmul.f32 1.0, %v1335
    %v1337 = vxor.u32 %v1328, 2147483648
    %v1338 = vmul.f32 %v1337, 1.442695
    %v1339 = vpow.pop %v1338
    %v1340 = vadd.f32 %v1339, 1.0
    %v1341 = vrcp.pop %v1340
    %v1342 = vmul.f32 1.0, %v1341
    %v1343 = vtanh.pop %v1329
    %v1344 = vxor.u32 %v1330, 2147483648
    %v1345 = vmul.f32 %v1344, 1.442695
    %v1346 = vpow.pop %v1345
    %v1347 = vadd.f32 %v1346, 1.0
    %v1348 = vrcp.pop %v1347
    %v1349 = vmul.f32 1.0, %v1348
    %v1350 = vmul.f32 %v1342, %v1177
    %v1351 = vmul.f32 %v1336, %v1343
    %v1352 = vadd.f32 %v1350, %v1351
    %v1353 = vtanh.pop %v1352
    %v1354 = vmul.f32 %v1349, %v1353
    %s1355 = scalar_lea.vmem [#allocation4], 224
    %v1356 = vld [vmem:[%s1355] sm:$0xff]
    %v1357 = vld [vmem:[%s1355 + $0x8] sm:$0xff]
    %v1358 = vld [vmem:[%s1355 + $0x10] sm:$0xff]
    %v1359 = vld [vmem:[%s1355 + $0x18] sm:$0xff]
    %1360 = vmatprep.subr.mxu0 %v132
    %1361 = vmatpush1.msra.mxu0 %v131
    %1362 = vmatprep.subr.mxu0 %v128
    %1363 = vmatpush1.msra.mxu0 %v127
    %1364 = vmatprep.subr.mxu0 %v124
    %1365 = vmatpush1.msra.mxu0 %v123
    %1366 = vmatprep.subr.mxu0 %v120
    %1367 = vmatpush1.msra.mxu0 %v119
    %1368 = vmatprep.subr.mxu0 %v116
    %1369 = vmatpush1.msra.mxu0 %v115
    %1370 = vmatprep.subr.mxu0 %v112
    %1371 = vmatpush1.msra.mxu0 %v111
    %1372 = vmatprep.subr.mxu0 %v108
    %1373 = vmatpush1.msra.mxu0 %v107
    %1374 = vmatprep.subr.mxu0 %v104
    %1375 = vmatpush1.msra.mxu0 %v103
    %1376 = vmatprep.subr.mxu0 %v100
    %1377 = vmatpush1.msra.mxu0 %v99
    %1378 = vmatprep.subr.mxu0 %v96
    %1379 = vmatpush1.msra.mxu0 %v95
    %1380 = vmatprep.subr.mxu0 %v92
    %1381 = vmatpush1.msra.mxu0 %v91
    %1382 = vmatprep.subr.mxu0 %v88
    %1383 = vmatpush1.msra.mxu0 %v87
    %1384 = vmatprep.subr.mxu0 %v84
    %1385 = vmatpush1.msra.mxu0 %v83
    %1386 = vmatprep.subr.mxu0 %v80
    %1387 = vmatpush1.msra.mxu0 %v79
    %1388 = vmatprep.subr.mxu0 %v76
    %1389 = vmatpush1.msra.mxu0 %v75
    %1390 = vmatprep.subr.mxu0 %v72
    %1391 = vmatpush1.msra.mxu0 %v71
    %1392 = vmatprep.subr.mxu0 0.0
    %1393 = vmatpush2.msra.mxu0 0.0
    %1394 = vmatprep.subr.mxu0 0.0
    %1395 = vmatpush2.msra.mxu0 0.0
    %1396 = vmatprep.subr.mxu0 0.0
    %1397 = vmatpush2.msra.mxu0 0.0
    %1398 = vmatprep.subr.mxu0 0.0
    %1399 = vmatpush2.msra.mxu0 0.0
    %1400 = vmatprep.subr.mxu0 0.0
    %1401 = vmatpush2.msra.mxu0 0.0
    %1402 = vmatprep.subr.mxu0 0.0
    %1403 = vmatpush2.msra.mxu0 0.0
    %1404 = vmatprep.subr.mxu0 0.0
    %1405 = vmatpush2.msra.mxu0 0.0
    %1406 = vmatprep.subr.mxu0 0.0
    %1407 = vmatpush2.msra.mxu0 0.0
    %1408 = vmatprep.subr.mxu0 0.0
    %1409 = vmatpush2.msra.mxu0 0.0
    %1410 = vmatprep.subr.mxu0 0.0
    %1411 = vmatpush2.msra.mxu0 0.0
    %1412 = vmatprep.subr.mxu0 0.0
    %1413 = vmatpush2.msra.mxu0 0.0
    %1414 = vmatprep.subr.mxu0 0.0
    %1415 = vmatpush2.msra.mxu0 0.0
    %1416 = vmatprep.subr.mxu0 0.0
    %1417 = vmatpush2.msra.mxu0 0.0
    %1418 = vmatprep.subr.mxu0 0.0
    %1419 = vmatpush2.msra.mxu0 0.0
    %1420 = vmatprep.subr.mxu0 0.0
    %1421 = vmatpush2.msra.mxu0 0.0
    %1422 = vmatprep.subr.mxu0 0.0
    %1423 = vmatpush2.msra.mxu0 0.0
    %1424 = vmatprep.mubr.f32.mxu0 0.0
    %1425 = vmatmul.mubr.f32.gmra.mxu0 %v1354
    %v1426 = vpop.f32.mrf.mxu0
    %v1427 = vadd.f32 0.0, %v1426
    %v1428 = vpop.f32.mrf.mxu0
    %v1429 = vadd.f32 0.0, %v1428
    %1430 = vdwg.mxu0
    %1431 = vmatprep.subr.mxu0 %v134
    %1432 = vmatpush1.msra.mxu0 %v133
    %1433 = vmatprep.subr.mxu0 %v130
    %1434 = vmatpush1.msra.mxu0 %v129
    %1435 = vmatprep.subr.mxu0 %v126
    %1436 = vmatpush1.msra.mxu0 %v125
    %1437 = vmatprep.subr.mxu0 %v122
    %1438 = vmatpush1.msra.mxu0 %v121
    %1439 = vmatprep.subr.mxu0 %v118
    %1440 = vmatpush1.msra.mxu0 %v117
    %1441 = vmatprep.subr.mxu0 %v114
    %1442 = vmatpush1.msra.mxu0 %v113
    %1443 = vmatprep.subr.mxu0 %v110
    %1444 = vmatpush1.msra.mxu0 %v109
    %1445 = vmatprep.subr.mxu0 %v106
    %1446 = vmatpush1.msra.mxu0 %v105
    %1447 = vmatprep.subr.mxu0 %v102
    %1448 = vmatpush1.msra.mxu0 %v101
    %1449 = vmatprep.subr.mxu0 %v98
    %1450 = vmatpush1.msra.mxu0 %v97
    %1451 = vmatprep.subr.mxu0 %v94
    %1452 = vmatpush1.msra.mxu0 %v93
    %1453 = vmatprep.subr.mxu0 %v90
    %1454 = vmatpush1.msra.mxu0 %v89
    %1455 = vmatprep.subr.mxu0 %v86
    %1456 = vmatpush1.msra.mxu0 %v85
    %1457 = vmatprep.subr.mxu0 %v82
    %1458 = vmatpush1.msra.mxu0 %v81
    %1459 = vmatprep.subr.mxu0 %v78
    %1460 = vmatpush1.msra.mxu0 %v77
    %1461 = vmatprep.subr.mxu0 %v74
    %1462 = vmatpush1.msra.mxu0 %v73
    %1463 = vmatprep.subr.mxu0 0.0
    %1464 = vmatpush2.msra.mxu0 0.0
    %1465 = vmatprep.subr.mxu0 0.0
    %1466 = vmatpush2.msra.mxu0 0.0
    %1467 = vmatprep.subr.mxu0 0.0
    %1468 = vmatpush2.msra.mxu0 0.0
    %1469 = vmatprep.subr.mxu0 0.0
    %1470 = vmatpush2.msra.mxu0 0.0
    %1471 = vmatprep.subr.mxu0 0.0
    %1472 = vmatpush2.msra.mxu0 0.0
    %1473 = vmatprep.subr.mxu0 0.0
    %1474 = vmatpush2.msra.mxu0 0.0
    %1475 = vmatprep.subr.mxu0 0.0
    %1476 = vmatpush2.msra.mxu0 0.0
    %1477 = vmatprep.subr.mxu0 0.0
    %1478 = vmatpush2.msra.mxu0 0.0
    %1479 = vmatprep.subr.mxu0 0.0
    %1480 = vmatpush2.msra.mxu0 0.0
    %1481 = vmatprep.subr.mxu0 0.0
    %1482 = vmatpush2.msra.mxu0 0.0
    %1483 = vmatprep.subr.mxu0 0.0
    %1484 = vmatpush2.msra.mxu0 0.0
    %1485 = vmatprep.subr.mxu0 0.0
    %1486 = vmatpush2.msra.mxu0 0.0
    %1487 = vmatprep.subr.mxu0 0.0
    %1488 = vmatpush2.msra.mxu0 0.0
    %1489 = vmatprep.subr.mxu0 0.0
    %1490 = vmatpush2.msra.mxu0 0.0
    %1491 = vmatprep.subr.mxu0 0.0
    %1492 = vmatpush2.msra.mxu0 0.0
    %1493 = vmatprep.subr.mxu0 0.0
    %1494 = vmatpush2.msra.mxu0 0.0
    %1495 = vmatprep.mubr.f32.mxu0 0.0
    %1496 = vmatmul.mubr.f32.gmra.mxu0 %v1354
    %v1497 = vpop.f32.mrf.mxu0
    %v1498 = vadd.f32 0.0, %v1497
    %v1499 = vpop.f32.mrf.mxu0
    %v1500 = vadd.f32 0.0, %v1499
    %1501 = vdwg.mxu0
    %v1502 = vadd.f32 %v1356, %v1427
    %v1503 = vadd.f32 %v1357, %v1429
    %v1504 = vadd.f32 %v1358, %v1498
    %v1505 = vadd.f32 %v1359, %v1500
    %v1506 = vxor.u32 %v1502, 2147483648
    %v1507 = vmul.f32 %v1506, 1.442695
    %v1508 = vpow.pop %v1507
    %v1509 = vadd.f32 %v1508, 1.0
    %v1510 = vrcp.pop %v1509
    %v1511 = vmul.f32 1.0, %v1510
    %v1512 = vxor.u32 %v1503, 2147483648
    %v1513 = vmul.f32 %v1512, 1.442695
    %v1514 = vpow.pop %v1513
    %v1515 = vadd.f32 %v1514, 1.0
    %v1516 = vrcp.pop %v1515
    %v1517 = vmul.f32 1.0, %v1516
    %v1518 = vtanh.pop %v1504
    %v1519 = vxor.u32 %v1505, 2147483648
    %v1520 = vmul.f32 %v1519, 1.442695
    %v1521 = vpow.pop %v1520
    %v1522 = vadd.f32 %v1521, 1.0
    %v1523 = vrcp.pop %v1522
    %v1524 = vmul.f32 1.0, %v1523
    %v1525 = vmul.f32 %v1517, %v1352
    %v1526 = vmul.f32 %v1511, %v1518
    %v1527 = vadd.f32 %v1525, %v1526
    %v1528 = vtanh.pop %v1527
    %v1529 = vmul.f32 %v1524, %v1528
    %1530 = vst [vmem:[#allocation2] sm:$0xff] %v1529
    %1531 = vst [vmem:[#allocation3] sm:$0xff] %v1527
    // Predicated region
    $region34: #{tpu_custom_call.1} parent=1 // pred_check
      %p1532 = pneg %p59
    $region35: #{tpu_custom_call.1} parent=1 // pred_check_branch
      %1534 = sbr.rel (%p1532) target = $region37
    $region36: #{tpu_custom_call.1} parent=1 // pred_region
      %v1535 = vld [vmem:[#allocation9] sm:$0xff]
      %v1536 = vld [vmem:[#allocation9 + $0x8] sm:$0xff]
      %v1537 = vld [vmem:[#allocation9 + $0x10] sm:$0xff]
      %v1538 = vld [vmem:[#allocation9 + $0x18] sm:$0xff]
      %v1539 = vld [vmem:[#allocation9 + $0x20] sm:$0xff]
      %v1540 = vld [vmem:[#allocation9 + $0x28] sm:$0xff]
      %v1541 = vld [vmem:[#allocation9 + $0x30] sm:$0xff]
      %v1542 = vld [vmem:[#allocation9 + $0x38] sm:$0xff]
      %v1543 = vld [vmem:[#allocation9 + $0x40] sm:$0xff]
      %v1544 = vld [vmem:[#allocation9 + $0x48] sm:$0xff]
      %v1545 = vld [vmem:[#allocation9 + $0x50] sm:$0xff]
      %v1546 = vld [vmem:[#allocation9 + $0x58] sm:$0xff]
      %v1547 = vld [vmem:[#allocation9 + $0x60] sm:$0xff]
      %v1548 = vld [vmem:[#allocation9 + $0x68] sm:$0xff]
      %v1549 = vld [vmem:[#allocation9 + $0x70] sm:$0xff]
      %v1550 = vld [vmem:[#allocation9 + $0x78] sm:$0xff]
      %v1551 = vld [vmem:[%s3] sm:$0x1]
      %v1553 = vlaneseq
      %v1554 = vshrl.u32 %v1553, 7
      %v1555 = vsub.s32 0, %v1554
      %v1556 = vrot.slane %v1551, %v1555
      %1558 = vmatprep.subr.mxu0 0.0
      %1559 = vmatpush1.msra.mxu0 %v1550
      %1560 = vmatprep.subr.mxu0 0.0
      %1561 = vmatpush1.msra.mxu0 %v1549
      %1562 = vmatprep.subr.mxu0 0.0
      %1563 = vmatpush1.msra.mxu0 %v1548
      %1564 = vmatprep.subr.mxu0 0.0
      %1565 = vmatpush1.msra.mxu0 %v1547
      %1566 = vmatprep.subr.mxu0 0.0
      %1567 = vmatpush1.msra.mxu0 %v1546
      %1568 = vmatprep.subr.mxu0 0.0
      %1569 = vmatpush1.msra.mxu0 %v1545
      %1570 = vmatprep.subr.mxu0 0.0
      %1571 = vmatpush1.msra.mxu0 %v1544
      %1572 = vmatprep.subr.mxu0 0.0
      %1573 = vmatpush1.msra.mxu0 %v1543
      %1574 = vmatprep.subr.mxu0 0.0
      %1575 = vmatpush1.msra.mxu0 %v1542
      %1576 = vmatprep.subr.mxu0 0.0
      %1577 = vmatpush1.msra.mxu0 %v1541
      %1578 = vmatprep.subr.mxu0 0.0
      %1579 = vmatpush1.msra.mxu0 %v1540
      %1580 = vmatprep.subr.mxu0 0.0
      %1581 = vmatpush1.msra.mxu0 %v1539
      %1582 = vmatprep.subr.mxu0 0.0
      %1583 = vmatpush1.msra.mxu0 %v1538
      %1584 = vmatprep.subr.mxu0 0.0
      %1585 = vmatpush1.msra.mxu0 %v1537
      %1586 = vmatprep.subr.mxu0 0.0
      %1587 = vmatpush1.msra.mxu0 %v1536
      %1588 = vmatprep.subr.mxu0 0.0
      %1589 = vmatpush1.msra.mxu0 %v1535
      %1590 = vmatprep.subr.mxu0 0.0
      %1591 = vmatpush2.msra.mxu0 0.0
      %1592 = vmatprep.subr.mxu0 0.0
      %1593 = vmatpush2.msra.mxu0 0.0
      %1594 = vmatprep.subr.mxu0 0.0
      %1595 = vmatpush2.msra.mxu0 0.0
      %1596 = vmatprep.subr.mxu0 0.0
      %1597 = vmatpush2.msra.mxu0 0.0
      %1598 = vmatprep.subr.mxu0 0.0
      %1599 = vmatpush2.msra.mxu0 0.0
      %1600 = vmatprep.subr.mxu0 0.0
      %1601 = vmatpush2.msra.mxu0 0.0
      %1602 = vmatprep.subr.mxu0 0.0
      %1603 = vmatpush2.msra.mxu0 0.0
      %1604 = vmatprep.subr.mxu0 0.0
      %1605 = vmatpush2.msra.mxu0 0.0
      %1606 = vmatprep.subr.mxu0 0.0
      %1607 = vmatpush2.msra.mxu0 0.0
      %1608 = vmatprep.subr.mxu0 0.0
      %1609 = vmatpush2.msra.mxu0 0.0
      %1610 = vmatprep.subr.mxu0 0.0
      %1611 = vmatpush2.msra.mxu0 0.0
      %1612 = vmatprep.subr.mxu0 0.0
      %1613 = vmatpush2.msra.mxu0 0.0
      %1614 = vmatprep.subr.mxu0 0.0
      %1615 = vmatpush2.msra.mxu0 0.0
      %1616 = vmatprep.subr.mxu0 0.0
      %1617 = vmatpush2.msra.mxu0 0.0
      %1618 = vmatprep.subr.mxu0 0.0
      %1619 = vmatpush2.msra.mxu0 0.0
      %1620 = vmatprep.subr.mxu0 0.0
      %1621 = vmatpush2.msra.mxu0 0.0
      %1622 = vmatprep.mubr.f32.mxu0 0.0
      %1623 = vmatmul.mubr.f32.gmra.mxu0 %v1529
      %v1624 = vpop.f32.mrf.mxu0
      %v1625 = vadd.f32 %v1556, %v1624
      %v1626 = vpop.f32.mrf.mxu0
      %1627 = vdwg.mxu0
      %v1628 = vlaneseq
      %v1629 = vand.u32 %v1628, 127
      %vm1630 = vcmp.lt.s32.totalorder %v1629, 5
      %v1631 = vsel %vm1630, %v1625, -1e+30
      %1632 = vmax.xlane.f32.xlu0 %v1631
      %v1633 = vpop.xlane.xlu0 %1632
      %v1634 = vsub.f32 %v1631, %v1633
      %v1635 = vmul.f32 %v1634, 1.442695
      %v1636 = vpow.pop %v1635
      %1637 = vadd.xlane.f32.xlu0 %v1636
      %v1638 = vpop.xlane.xlu0 %1637
      %v1639 = vlog2.pop %v1638
      %v1640 = vmul.f32 %v1639, 0.6931472
      %v1641 = vadd.f32 %v1640, %v1633
      %v1642 = vsub.f32 %v1631, %v1641
      %1643 = vst [vmem:[#allocation10] sm:$0xff] %v1642
    $region37: #{tpu_custom_call.1} parent=1 // pred_fallthru
      _
    // Predicated region
    $region38: #{tpu_custom_call.1} parent=1 // pred_check
      _
    $region39: #{tpu_custom_call.1} parent=1 // pred_check_branch
      %1645 = sbr.rel (0) target = $region41
    $region40: #{tpu_custom_call.1} parent=1 // pred_region
      %s1647 = ssub.s32 128, 128
      %1648 = vsyncadd [#allocation6], %s1647
      %s1650 = sshll.u32 [#allocation10], 4
      %s1651 = int_to_ptr.vmem [resolvable:$true] %s1650
      %1653 = dma.vmem_to_hbm [thread:$0]  %s1651, 128, %s4, [#allocation6]
    $region41: #{tpu_custom_call.1} parent=1 // pred_fallthru
      _
    // Predicated region
    $region42: #{tpu_custom_call.1} parent=1 // pred_check
      _
    $region43: #{tpu_custom_call.1} parent=1 // pred_check_branch
      %1655 = sbr.rel (0) target = $region45
    $region44: #{tpu_custom_call.1} parent=1 // pred_region
      %1656 = dma.done [#allocation6], 128
    $region45: #{tpu_custom_call.1} parent=1 // pred_fallthru
      _
    %1657 = vsyncpa [#allocation5], 1
    %1658 = vsyncpa [#allocation8], 1
    %1659 = vsyncpa [#allocation6], 1

</llo_original>
